<compile_context>
chip_gen: v7x
topology: tpu7x:2x2x1
jax: 0.10.0
libtpu: 0.0.40
codegen_flags: <defaults>
</compile_context>

<pallas_src>
import jax
import jax.numpy as jnp
from jax.experimental import pallas as pl
from jax.experimental.pallas import tpu as pltpu

N, C_IN, H, W = 2, 4, 16, 16
C_MID = 8
KH = KW = 3
HW = H * W
PAD = 32  # >= 17 (max |flattened tap offset|); 32 keeps the interior store sublane-aligned


# ---------------------------------------------------------------------------
# Fused kernel: Conv2d(3x3, pad=1) + bias + ReLU + AdaptiveAvgPool2d(1), one image per grid step.
# ---------------------------------------------------------------------------
def fused_conv_relu_pool_kernel(x_ref, w_ref, b_ref, feat_ref, pool_ref, pad_ref):
    # x_ref:    (1, H*W, C_IN)        image, pixels (p = y*W + x) on sublanes, channels on lanes
    # w_ref:    (KH*KW, C_MID, C_IN)  conv weights, one (C_MID, C_IN) slab per tap
    # b_ref:    (C_MID, 1)
    # feat_ref: (1, C_MID, H*W)       lane-dense flattened relu features (NCHW flatten order)
    # pool_ref: (1, C_MID, 1)         global average pool
    # pad_ref:  VMEM scratch (PAD + H*W + PAD, C_IN): zero-padded flattened image

    # ---- in-kernel zero padding (replaces wrapper-side jnp.pad) ----
    pad_ref[...] = jnp.zeros_like(pad_ref)
    pad_ref[PAD:PAD + HW, :] = x_ref[0]

    # Column-validity masks: a flattened shift by dx = +/-1 wraps across image rows at x = 0 / W-1.
    col = jax.lax.broadcasted_iota(jnp.int32, (HW, 1), 0) % W
    not_first_col = col != 0        # valid source pixels for kw == 0 (dx = -1)
    not_last_col = col != (W - 1)   # valid source pixels for kw == 2 (dx = +1)

    acc = jnp.zeros((C_MID, HW), jnp.float32)
    for kh in range(KH):                                  # static 3x3 taps, fully unrolled
        for kw in range(KW):
            s = (kh - 1) * W + (kw - 1)                   # flattened source-pixel offset
            patch = pad_ref[PAD + s:PAD + s + HW, :]      # (H*W, C_IN) static sublane slice
            if kw == 0:
                patch = jnp.where(not_first_col, patch, 0.0)
            elif kw == 2:
                patch = jnp.where(not_last_col, patch, 0.0)
            w_tap = w_ref[kh * KW + kw]                   # (C_MID, C_IN)
            # (C_MID, C_IN) x (H*W, C_IN)^T -> (C_MID, H*W): lane-dense MXU matmul (N = 256)
            acc = acc + jax.lax.dot_general(
                w_tap, patch,
                dimension_numbers=(((1,), (1,)), ((), ())),
                preferred_element_type=jnp.float32)

    relu = jnp.maximum(acc + b_ref[...], 0.0)             # (C_MID, H*W) == per-image NCHW flatten
    feat_ref[...] = relu[None]                            # relu hook features
    pool_ref[...] = jnp.mean(relu, axis=1, keepdims=True)[None]   # pool hook features


# ---------------------------------------------------------------------------
# Wrapper
# ---------------------------------------------------------------------------
def fused_feature_kernel(x_cols, w_taps, b_col):
    return pl.pallas_call(
        fused_conv_relu_pool_kernel,
        out_shape=(
            jax.ShapeDtypeStruct((N, C_MID, HW), jnp.float32),
            jax.ShapeDtypeStruct((N, C_MID, 1), jnp.float32),
        ),
        grid_spec=pltpu.PrefetchScalarGridSpec(
            num_scalar_prefetch=0,
            grid=(N,),
            in_specs=[
                pl.BlockSpec((1, HW, C_IN), lambda n: (n, 0, 0)),
                pl.BlockSpec((KH * KW, C_MID, C_IN), lambda n: (0, 0, 0)),
                pl.BlockSpec((C_MID, 1), lambda n: (0, 0)),
            ],
            out_specs=[
                pl.BlockSpec((1, C_MID, HW), lambda n: (n, 0, 0)),
                pl.BlockSpec((1, C_MID, 1), lambda n: (n, 0, 0)),
            ],
            scratch_shapes=[pltpu.VMEM((PAD + HW + PAD, C_IN), jnp.float32)],
        ),
        compiler_params=pltpu.CompilerParams(dimension_semantics=("parallel",)),
    )(x_cols, w_taps, b_col)


def feature_extractor_forward(x_nchw, params):
    # Hooked layers (topk=2, Linear head excluded): relu output, pool output.
    # Tiny (8 KiB) input transpose so channels sit on the lane axis inside the kernel.
    x_cols = jnp.transpose(x_nchw, (0, 2, 3, 1)).reshape(N, HW, C_IN)
    # conv_w is torch-style OIHW; regroup per tap: (KH*KW, C_MID, C_IN). ~1 KiB, negligible.
    w_taps = jnp.transpose(params["conv_w"], (2, 3, 0, 1)).reshape(KH * KW, C_MID, C_IN)
    b_col = params["conv_b"].reshape(C_MID, 1)

    feat, pool = fused_feature_kernel(x_cols, w_taps, b_col)
    relu_flat = feat.reshape(N, C_MID * HW)   # contiguous collapse == torch flatten(1) on NCHW
    pooled = pool.reshape(N, C_MID)
    # torch.cat in named_children order: relu first, then pool
    return jnp.concatenate([relu_flat, pooled], axis=1)   # (N, C_MID*H*W + C_MID)


# ---------------------------------------------------------------------------
# Pure-JAX reference for verification
# ---------------------------------------------------------------------------
def reference_forward(x_nchw, params):
    conv = jax.lax.conv_general_dilated(
        x_nchw, params["conv_w"], window_strides=(1, 1), padding=((1, 1), (1, 1)),
        dimension_numbers=("NCHW", "OIHW", "NCHW"),
    ) + params["conv_b"].reshape(1, C_MID, 1, 1)
    relu = jnp.maximum(conv, 0.0)
    pool = jnp.mean(relu, axis=(2, 3))
    return jnp.concatenate([relu.reshape(N, -1), pool], axis=1)


if __name__ == "__main__":
    key = jax.random.PRNGKey(0)
    kx, kw, kb = jax.random.split(key, 3)
    x = jax.random.normal(kx, (N, C_IN, H, W), dtype=jnp.float32)
    params = {
        "conv_w": 0.1 * jax.random.normal(kw, (C_MID, C_IN, KH, KW), dtype=jnp.float32),
        "conv_b": 0.1 * jax.random.normal(kb, (C_MID,), dtype=jnp.float32),
    }

    fwd = jax.jit(feature_extractor_forward)
    out = jax.block_until_ready(fwd(x, params))
    ref = jax.block_until_ready(reference_forward(x, params))

    assert out.shape == (N, C_MID * H * W + C_MID), out.shape
    assert jnp.allclose(out, ref, atol=1e-4, rtol=1e-4), float(jnp.max(jnp.abs(out - ref)))
    print("KERNEL_OK")
</pallas_src>

<mosaic_0001>
module attributes {stable_mosaic.version = 11 : i64} {
  func.func @fused_conv_relu_pool_kernel(%arg0: i32, %arg1: memref<1x256x4xf32, #tpu.memory_space<vmem>>, %arg2: memref<9x8x4xf32, #tpu.memory_space<vmem>>, %arg3: memref<8x1xf32, #tpu.memory_space<vmem>>, %arg4: memref<1x8x256xf32, #tpu.memory_space<vmem>>, %arg5: memref<1x8x1xf32, #tpu.memory_space<vmem>>, %arg6: memref<320x4xf32, #tpu.memory_space<vmem>>) attributes {dimension_semantics = [#tpu.dimension_semantics<parallel>], iteration_bounds = array<i64: 2>, scalar_prefetch = 0 : i64, scratch_operands = 1 : i64, tpu.core_type = #tpu.core_type<tc>, window_params = [{transform_indices = @transform_0, window_bounds = array<i64: 1, 256, 4>}, {pipeline_mode = #tpu.pipeline_mode<synchronous>, transform_indices = @transform_1, window_bounds = array<i64: 9, 8, 4>}, {pipeline_mode = #tpu.pipeline_mode<synchronous>, transform_indices = @transform_2, window_bounds = array<i64: 8, 1>}, {transform_indices = @transform_3, window_bounds = array<i64: 1, 8, 256>}, {transform_indices = @transform_4, window_bounds = array<i64: 1, 8, 1>}]} {
    %cst = arith.constant 0.000000e+00 : f32
    %0 = vector.broadcast %cst : f32 to vector<320x4xf32>
    %c0 = arith.constant 0 : index
    %c0_0 = arith.constant 0 : index
    %1 = vector.load %arg6[%c0, %c0_0] : memref<320x4xf32, #tpu.memory_space<vmem>>, vector<320x4xf32>
    tpu.vector_store %arg6[%c0, %c0_0], %0 {strides = array<i32>} : memref<320x4xf32, #tpu.memory_space<vmem>>, vector<320x4xf32>,
    %c0_1 = arith.constant 0 : index
    %c0_2 = arith.constant 0 : index
    %c0_3 = arith.constant 0 : index
    %2 = vector.load %arg1[%c0_1, %c0_2, %c0_3] : memref<1x256x4xf32, #tpu.memory_space<vmem>>, vector<1x256x4xf32>
    %3 = vector.shape_cast %2 : vector<1x256x4xf32> to vector<256x4xf32>
    %c32 = arith.constant 32 : index
    %c0_4 = arith.constant 0 : index
    %4 = vector.load %arg6[%c32, %c0_4] : memref<320x4xf32, #tpu.memory_space<vmem>>, vector<256x4xf32>
    tpu.vector_store %arg6[%c32, %c0_4], %3 {strides = array<i32>} : memref<320x4xf32, #tpu.memory_space<vmem>>, vector<256x4xf32>,
    %5 = tpu.iota {dimensions = array<i32: 0>} : vector<256x1xi32>
    %c16_i32 = arith.constant 16 : i32
    %c0_i32 = arith.constant 0 : i32
    %6 = arith.cmpi eq, %c16_i32, %c0_i32 : i32
    %c1_i32 = arith.constant 1 : i32
    %7 = arith.select %6, %c1_i32, %c16_i32 : i32
    %8 = vector.broadcast %7 : i32 to vector<256x1xi32>
    %9 = arith.remsi %5, %8 : vector<256x1xi32>
    %c0_i32_5 = arith.constant 0 : i32
    %10 = vector.broadcast %c0_i32_5 : i32 to vector<256x1xi32>
    %11 = arith.cmpi ne, %9, %10 : vector<256x1xi32>
    %c0_i32_6 = arith.constant 0 : i32
    %12 = vector.broadcast %c0_i32_6 : i32 to vector<256x1xi32>
    %13 = arith.cmpi slt, %9, %12 : vector<256x1xi32>
    %c0_i32_7 = arith.constant 0 : i32
    %14 = arith.cmpi slt, %7, %c0_i32_7 : i32
    %15 = vector.broadcast %14 : i1 to vector<256x1xi1>
    %16 = vector.broadcast %15 : vector<256x1xi1> to vector<256x1xi1>
    %17 = arith.xori %13, %16 : vector<256x1xi1>
    %18 = arith.andi %17, %11 : vector<256x1xi1>
    %19 = vector.broadcast %7 : i32 to vector<256x1xi32>
    %20 = arith.addi %9, %19 : vector<256x1xi32>
    %21 = arith.select %18, %20, %9 : vector<256x1xi1>, vector<256x1xi32>
    %c0_i32_8 = arith.constant 0 : i32
    %22 = vector.broadcast %c0_i32_8 : i32 to vector<256x1xi32>
    %23 = arith.cmpi ne, %21, %22 : vector<256x1xi32>
    %c15_i32 = arith.constant 15 : i32
    %24 = vector.broadcast %c15_i32 : i32 to vector<256x1xi32>
    %25 = arith.cmpi ne, %21, %24 : vector<256x1xi32>
    %cst_9 = arith.constant 0.000000e+00 : f32
    %26 = vector.broadcast %cst_9 : f32 to vector<8x256xf32>
    %c15 = arith.constant 15 : index
    %c0_10 = arith.constant 0 : index
    %27 = vector.load %arg6[%c15, %c0_10] : memref<320x4xf32, #tpu.memory_space<vmem>>, vector<256x4xf32>
    %cst_11 = arith.constant 0.000000e+00 : f32
    %28 = vector.shape_cast %23 : vector<256x1xi1> to vector<256x1xi1>
    %29 = vector.broadcast %28 : vector<256x1xi1> to vector<256x4xi1>
    %30 = vector.broadcast %cst_11 : f32 to vector<256x4xf32>
    %31 = arith.select %29, %27, %30 : vector<256x4xi1>, vector<256x4xf32>
    %c0_12 = arith.constant 0 : index
    %c0_13 = arith.constant 0 : index
    %c0_14 = arith.constant 0 : index
    %32 = vector.load %arg2[%c0_12, %c0_13, %c0_14] : memref<9x8x4xf32, #tpu.memory_space<vmem>>, vector<1x8x4xf32>
    %33 = vector.shape_cast %32 : vector<1x8x4xf32> to vector<8x4xf32>
    %cst_15 = arith.constant dense<0.000000e+00> : vector<8x256xf32>
    %34 = tpu.matmul %33, %31, %cst_15 {dimension_numbers = #tpu.dot_dimension_numbers<[1], [1], [0], [0], [0, 0, 1, 0], [], []>} : vector<8x4xf32>, vector<256x4xf32>, vector<8x256xf32> -> vector<8x256xf32>
    %35 = arith.addf %26, %34 : vector<8x256xf32>
    %c16 = arith.constant 16 : index
    %c0_16 = arith.constant 0 : index
    %36 = vector.load %arg6[%c16, %c0_16] : memref<320x4xf32, #tpu.memory_space<vmem>>, vector<256x4xf32>
    %c1 = arith.constant 1 : index
    %c0_17 = arith.constant 0 : index
    %c0_18 = arith.constant 0 : index
    %37 = vector.load %arg2[%c1, %c0_17, %c0_18] : memref<9x8x4xf32, #tpu.memory_space<vmem>>, vector<1x8x4xf32>
    %38 = vector.shape_cast %37 : vector<1x8x4xf32> to vector<8x4xf32>
    %cst_19 = arith.constant dense<0.000000e+00> : vector<8x256xf32>
    %39 = tpu.matmul %38, %36, %cst_19 {dimension_numbers = #tpu.dot_dimension_numbers<[1], [1], [0], [0], [0, 0, 1, 0], [], []>} : vector<8x4xf32>, vector<256x4xf32>, vector<8x256xf32> -> vector<8x256xf32>
    %40 = arith.addf %35, %39 : vector<8x256xf32>
    %c17 = arith.constant 17 : index
    %c0_20 = arith.constant 0 : index
    %41 = vector.load %arg6[%c17, %c0_20] : memref<320x4xf32, #tpu.memory_space<vmem>>, vector<256x4xf32>
    %cst_21 = arith.constant 0.000000e+00 : f32
    %42 = vector.shape_cast %25 : vector<256x1xi1> to vector<256x1xi1>
    %43 = vector.broadcast %42 : vector<256x1xi1> to vector<256x4xi1>
    %44 = vector.broadcast %cst_21 : f32 to vector<256x4xf32>
    %45 = arith.select %43, %41, %44 : vector<256x4xi1>, vector<256x4xf32>
    %c2 = arith.constant 2 : index
    %c0_22 = arith.constant 0 : index
    %c0_23 = arith.constant 0 : index
    %46 = vector.load %arg2[%c2, %c0_22, %c0_23] : memref<9x8x4xf32, #tpu.memory_space<vmem>>, vector<1x8x4xf32>
    %47 = vector.shape_cast %46 : vector<1x8x4xf32> to vector<8x4xf32>
    %cst_24 = arith.constant dense<0.000000e+00> : vector<8x256xf32>
    %48 = tpu.matmul %47, %45, %cst_24 {dimension_numbers = #tpu.dot_dimension_numbers<[1], [1], [0], [0], [0, 0, 1, 0], [], []>} : vector<8x4xf32>, vector<256x4xf32>, vector<8x256xf32> -> vector<8x256xf32>
    %49 = arith.addf %40, %48 : vector<8x256xf32>
    %c31 = arith.constant 31 : index
    %c0_25 = arith.constant 0 : index
    %50 = vector.load %arg6[%c31, %c0_25] : memref<320x4xf32, #tpu.memory_space<vmem>>, vector<256x4xf32>
    %cst_26 = arith.constant 0.000000e+00 : f32
    %51 = vector.shape_cast %23 : vector<256x1xi1> to vector<256x1xi1>
    %52 = vector.broadcast %51 : vector<256x1xi1> to vector<256x4xi1>
    %53 = vector.broadcast %cst_26 : f32 to vector<256x4xf32>
    %54 = arith.select %52, %50, %53 : vector<256x4xi1>, vector<256x4xf32>
    %c3 = arith.constant 3 : index
    %c0_27 = arith.constant 0 : index
    %c0_28 = arith.constant 0 : index
    %55 = vector.load %arg2[%c3, %c0_27, %c0_28] : memref<9x8x4xf32, #tpu.memory_space<vmem>>, vector<1x8x4xf32>
    %56 = vector.shape_cast %55 : vector<1x8x4xf32> to vector<8x4xf32>
    %cst_29 = arith.constant dense<0.000000e+00> : vector<8x256xf32>
    %57 = tpu.matmul %56, %54, %cst_29 {dimension_numbers = #tpu.dot_dimension_numbers<[1], [1], [0], [0], [0, 0, 1, 0], [], []>} : vector<8x4xf32>, vector<256x4xf32>, vector<8x256xf32> -> vector<8x256xf32>
    %58 = arith.addf %49, %57 : vector<8x256xf32>
    %c32_30 = arith.constant 32 : index
    %c0_31 = arith.constant 0 : index
    %59 = vector.load %arg6[%c32_30, %c0_31] : memref<320x4xf32, #tpu.memory_space<vmem>>, vector<256x4xf32>
    %c4 = arith.constant 4 : index
    %c0_32 = arith.constant 0 : index
    %c0_33 = arith.constant 0 : index
    %60 = vector.load %arg2[%c4, %c0_32, %c0_33] : memref<9x8x4xf32, #tpu.memory_space<vmem>>, vector<1x8x4xf32>
    %61 = vector.shape_cast %60 : vector<1x8x4xf32> to vector<8x4xf32>
    %cst_34 = arith.constant dense<0.000000e+00> : vector<8x256xf32>
    %62 = tpu.matmul %61, %59, %cst_34 {dimension_numbers = #tpu.dot_dimension_numbers<[1], [1], [0], [0], [0, 0, 1, 0], [], []>} : vector<8x4xf32>, vector<256x4xf32>, vector<8x256xf32> -> vector<8x256xf32>
    %63 = arith.addf %58, %62 : vector<8x256xf32>
    %c33 = arith.constant 33 : index
    %c0_35 = arith.constant 0 : index
    %64 = vector.load %arg6[%c33, %c0_35] : memref<320x4xf32, #tpu.memory_space<vmem>>, vector<256x4xf32>
    %cst_36 = arith.constant 0.000000e+00 : f32
    %65 = vector.shape_cast %25 : vector<256x1xi1> to vector<256x1xi1>
    %66 = vector.broadcast %65 : vector<256x1xi1> to vector<256x4xi1>
    %67 = vector.broadcast %cst_36 : f32 to vector<256x4xf32>
    %68 = arith.select %66, %64, %67 : vector<256x4xi1>, vector<256x4xf32>
    %c5 = arith.constant 5 : index
    %c0_37 = arith.constant 0 : index
    %c0_38 = arith.constant 0 : index
    %69 = vector.load %arg2[%c5, %c0_37, %c0_38] : memref<9x8x4xf32, #tpu.memory_space<vmem>>, vector<1x8x4xf32>
    %70 = vector.shape_cast %69 : vector<1x8x4xf32> to vector<8x4xf32>
    %cst_39 = arith.constant dense<0.000000e+00> : vector<8x256xf32>
    %71 = tpu.matmul %70, %68, %cst_39 {dimension_numbers = #tpu.dot_dimension_numbers<[1], [1], [0], [0], [0, 0, 1, 0], [], []>} : vector<8x4xf32>, vector<256x4xf32>, vector<8x256xf32> -> vector<8x256xf32>
    %72 = arith.addf %63, %71 : vector<8x256xf32>
    %c47 = arith.constant 47 : index
    %c0_40 = arith.constant 0 : index
    %73 = vector.load %arg6[%c47, %c0_40] : memref<320x4xf32, #tpu.memory_space<vmem>>, vector<256x4xf32>
    %cst_41 = arith.constant 0.000000e+00 : f32
    %74 = vector.shape_cast %23 : vector<256x1xi1> to vector<256x1xi1>
    %75 = vector.broadcast %74 : vector<256x1xi1> to vector<256x4xi1>
    %76 = vector.broadcast %cst_41 : f32 to vector<256x4xf32>
    %77 = arith.select %75, %73, %76 : vector<256x4xi1>, vector<256x4xf32>
    %c6 = arith.constant 6 : index
    %c0_42 = arith.constant 0 : index
    %c0_43 = arith.constant 0 : index
    %78 = vector.load %arg2[%c6, %c0_42, %c0_43] : memref<9x8x4xf32, #tpu.memory_space<vmem>>, vector<1x8x4xf32>
    %79 = vector.shape_cast %78 : vector<1x8x4xf32> to vector<8x4xf32>
    %cst_44 = arith.constant dense<0.000000e+00> : vector<8x256xf32>
    %80 = tpu.matmul %79, %77, %cst_44 {dimension_numbers = #tpu.dot_dimension_numbers<[1], [1], [0], [0], [0, 0, 1, 0], [], []>} : vector<8x4xf32>, vector<256x4xf32>, vector<8x256xf32> -> vector<8x256xf32>
    %81 = arith.addf %72, %80 : vector<8x256xf32>
    %c48 = arith.constant 48 : index
    %c0_45 = arith.constant 0 : index
    %82 = vector.load %arg6[%c48, %c0_45] : memref<320x4xf32, #tpu.memory_space<vmem>>, vector<256x4xf32>
    %c7 = arith.constant 7 : index
    %c0_46 = arith.constant 0 : index
    %c0_47 = arith.constant 0 : index
    %83 = vector.load %arg2[%c7, %c0_46, %c0_47] : memref<9x8x4xf32, #tpu.memory_space<vmem>>, vector<1x8x4xf32>
    %84 = vector.shape_cast %83 : vector<1x8x4xf32> to vector<8x4xf32>
    %cst_48 = arith.constant dense<0.000000e+00> : vector<8x256xf32>
    %85 = tpu.matmul %84, %82, %cst_48 {dimension_numbers = #tpu.dot_dimension_numbers<[1], [1], [0], [0], [0, 0, 1, 0], [], []>} : vector<8x4xf32>, vector<256x4xf32>, vector<8x256xf32> -> vector<8x256xf32>
    %86 = arith.addf %81, %85 : vector<8x256xf32>
    %c49 = arith.constant 49 : index
    %c0_49 = arith.constant 0 : index
    %87 = vector.load %arg6[%c49, %c0_49] : memref<320x4xf32, #tpu.memory_space<vmem>>, vector<256x4xf32>
    %cst_50 = arith.constant 0.000000e+00 : f32
    %88 = vector.shape_cast %25 : vector<256x1xi1> to vector<256x1xi1>
    %89 = vector.broadcast %88 : vector<256x1xi1> to vector<256x4xi1>
    %90 = vector.broadcast %cst_50 : f32 to vector<256x4xf32>
    %91 = arith.select %89, %87, %90 : vector<256x4xi1>, vector<256x4xf32>
    %c8 = arith.constant 8 : index
    %c0_51 = arith.constant 0 : index
    %c0_52 = arith.constant 0 : index
    %92 = vector.load %arg2[%c8, %c0_51, %c0_52] : memref<9x8x4xf32, #tpu.memory_space<vmem>>, vector<1x8x4xf32>
    %93 = vector.shape_cast %92 : vector<1x8x4xf32> to vector<8x4xf32>
    %cst_53 = arith.constant dense<0.000000e+00> : vector<8x256xf32>
    %94 = tpu.matmul %93, %91, %cst_53 {dimension_numbers = #tpu.dot_dimension_numbers<[1], [1], [0], [0], [0, 0, 1, 0], [], []>} : vector<8x4xf32>, vector<256x4xf32>, vector<8x256xf32> -> vector<8x256xf32>
    %95 = arith.addf %86, %94 : vector<8x256xf32>
    %c0_54 = arith.constant 0 : index
    %c0_55 = arith.constant 0 : index
    %96 = vector.load %arg3[%c0_54, %c0_55] : memref<8x1xf32, #tpu.memory_space<vmem>>, vector<8x1xf32>
    %97 = vector.broadcast %96 : vector<8x1xf32> to vector<8x256xf32>
    %98 = arith.addf %95, %97 : vector<8x256xf32>
    %cst_56 = arith.constant 0.000000e+00 : f32
    %99 = vector.broadcast %cst_56 : f32 to vector<8x256xf32>
    %100 = arith.maximumf %98, %99 : vector<8x256xf32>
    %101 = vector.shape_cast %100 : vector<8x256xf32> to vector<1x8x256xf32>
    %c0_57 = arith.constant 0 : index
    %c0_58 = arith.constant 0 : index
    %c0_59 = arith.constant 0 : index
    %102 = vector.load %arg4[%c0_57, %c0_58, %c0_59] : memref<1x8x256xf32, #tpu.memory_space<vmem>>, vector<1x8x256xf32>
    tpu.vector_store %arg4[%c0_57, %c0_58, %c0_59], %101 {strides = array<i32>} : memref<1x8x256xf32, #tpu.memory_space<vmem>>, vector<1x8x256xf32>,
    %cst_60 = arith.constant dense<0.000000e+00> : vector<8xf32>
    %103 = vector.multi_reduction <add>, %100, %cst_60 [1] : vector<8x256xf32> to vector<8xf32>
    %104 = vector.shape_cast %103 : vector<8xf32> to vector<8x1xf32>
    %cst_61 = arith.constant 2.560000e+02 : f32
    %105 = vector.broadcast %cst_61 : f32 to vector<8x1xf32>
    %106 = arith.divf %104, %105 : vector<8x1xf32>
    %107 = vector.shape_cast %106 : vector<8x1xf32> to vector<1x8x1xf32>
    %c0_62 = arith.constant 0 : index
    %c0_63 = arith.constant 0 : index
    %c0_64 = arith.constant 0 : index
    %108 = vector.load %arg5[%c0_62, %c0_63, %c0_64] : memref<1x8x1xf32, #tpu.memory_space<vmem>>, vector<1x8x1xf32>
    tpu.vector_store %arg5[%c0_62, %c0_63, %c0_64], %107 {strides = array<i32>} : memref<1x8x1xf32, #tpu.memory_space<vmem>>, vector<1x8x1xf32>,
    return
  }
  func.func @transform_0(%arg0: i32) -> (i32, i32, i32) {
    %c0_i32 = arith.constant 0 : i32
    %c0_i32_0 = arith.constant 0 : i32
    %c0_i32_1 = arith.constant 0 : i32
    return %arg0, %c0_i32, %c0_i32_0 : i32, i32, i32
  }
  func.func @transform_1(%arg0: i32) -> (i32, i32, i32) {
    %c0_i32 = arith.constant 0 : i32
    %c0_i32_0 = arith.constant 0 : i32
    %c0_i32_1 = arith.constant 0 : i32
    %c0_i32_2 = arith.constant 0 : i32
    return %c0_i32, %c0_i32_0, %c0_i32_1 : i32, i32, i32
  }
  func.func @transform_2(%arg0: i32) -> (i32, i32) {
    %c0_i32 = arith.constant 0 : i32
    %c0_i32_0 = arith.constant 0 : i32
    %c0_i32_1 = arith.constant 0 : i32
    return %c0_i32, %c0_i32_0 : i32, i32
  }
  func.func @transform_3(%arg0: i32) -> (i32, i32, i32) {
    %c0_i32 = arith.constant 0 : i32
    %c0_i32_0 = arith.constant 0 : i32
    %c0_i32_1 = arith.constant 0 : i32
    return %arg0, %c0_i32, %c0_i32_0 : i32, i32, i32
  }
  func.func @transform_4(%arg0: i32) -> (i32, i32, i32) {
    %c0_i32 = arith.constant 0 : i32
    %c0_i32_0 = arith.constant 0 : i32
    %c0_i32_1 = arith.constant 0 : i32
    return %arg0, %c0_i32, %c0_i32_0 : i32, i32, i32
  }
}

</mosaic_0001>

<llo_original>
// kernel: feature_extractor_forward.1
$region0: #{feature_extractor_forward.1}
  #allocation0 [shape = 'u32[]', space=smem, size = 0x4, offset = 0x4, fixed_abs, tag = 'smem constant byte address 0x4 - core index']
  #allocation1 [shape = 'u32[144,128]{1,0:T(1,128)}', space=vmem, size = 0x12000, scoped, tag = 'internal scratch']
  #allocation2 [shape = 'f32[320,4]{1,0:T(8,128)}', space=vmem, size = 0x28000, scoped, tag = 'scratch operand']
  %s0 = inlined_call_operand.vmem [shape: f32[2,256,4], index: 0, kind: input, shape index: {}]
  %s1 = inlined_call_operand.vmem [shape: f32[9,8,4], index: 1, kind: input, shape index: {}]
  %s2 = inlined_call_operand.vmem [shape: f32[8,1], index: 2, kind: input, shape index: {}]
  %s3 = inlined_call_operand.vmem [shape: f32[2,8,256], index: 3, kind: output, shape index: {0}]
  %s4 = inlined_call_operand.vmem [shape: f32[2,8,1], index: 4, kind: output, shape index: {1}]
  %5 = xla_tuple %s3, %s4
  %s6 = sld [smem:[#allocation0]]
  $region53: #{feature_extractor_forward.1} parent=0
    _
  %s8 = ssub.s32 1, %s6
  %s9 = scalar_select 0, %s8, %s6
  loop: start=0, step=1, limit=4
  $region2: #{feature_extractor_forward.1} parent=0 // loop_pre_header
    _
  $region3: #{feature_extractor_forward.1} parent=0 // loop_header
    %s11 = sphi 0, %s15
    %p12 = scmp.ge.s32.totalorder %s11, 4
    %s21 = sphi 0, %s23
    %s24 = sphi 0, %s21
    %s25 = sphi 0, %s24
    %s41 = sphi 0, %s25
    %s45 = sphi 0, %s45
    %s47 = sphi 0, %s45
    %s48 = sphi 0, %s47
    %s62 = sphi 0, %s48
    %s66 = sphi 0, %s66
    %s68 = sphi 0, %s66
    %s69 = sphi 0, %s68
    %s83 = sphi 0, %s69
    %s89 = sphi 0, %s91
    %s92 = sphi 0, %s89
    %s93 = sphi 0, %s92
    %s109 = sphi 0, %s93
    %s115 = sphi 0, %s117
    %s118 = sphi 0, %s115
    %s119 = sphi 0, %s118
    %s135 = sphi 0, %s119
  $region4: #{feature_extractor_forward.1} parent=0 // loop_header_branch
    %14 = sbr.rel (%p12) target = $region8
  $region5: #{feature_extractor_forward.1} parent=0 // loop_body
    %s16 = ssub.s32 %s11, 1
    %s17 = ssub.s32 %s11, 2
    %s18 = sadd.s32 %s11, 1
    %s19 = ssub.s32 %s11, %s18
    %p20 = scmp.eq.s32.totalorder %s19, 0
    %s22 = sadd.s32 %s21, 1
    %s23 = scalar_select %p20, %s21, %s22
    %p26 = pneg %p20
    %p27 = scmp.eq.s32.totalorder %s11, 1
    %p28 = por %p26, %p27
    %p29 = scmp.ne.s32.totalorder %s21, %s24
    %p30 = scmp.eq.s32.totalorder %s11, 0
    %p31 = por %p29, %p30
    %p32 = scmp.ne.s32.totalorder %s21, %s24
    %p33 = scmp.eq.s32.totalorder %s16, 1
    %p34 = por %p32, %p33
    %p35 = scmp.ne.s32.totalorder %s24, %s25
    %p36 = scmp.eq.s32.totalorder %s16, 0
    %p37 = por %p35, %p36
    %p38 = scmp.ne.s32.totalorder %s24, %s25
    %p39 = scmp.eq.s32.totalorder %s17, 1
    %p40 = por %p38, %p39
    %p42 = scmp.ne.s32.totalorder %s25, %s41
    %p43 = scmp.eq.s32.totalorder %s17, 0
    %p44 = por %p42, %p43
    %s46 = sadd.s32 %s45, 1
    %p49 = scmp.eq.s32.totalorder %s11, 1
    %p50 = scmp.ne.s32.totalorder %s45, %s47
    %p51 = scmp.eq.s32.totalorder %s11, 0
    %p52 = por %p50, %p51
    %p53 = scmp.ne.s32.totalorder %s45, %s47
    %p54 = scmp.eq.s32.totalorder %s16, 1
    %p55 = por %p53, %p54
    %p56 = scmp.ne.s32.totalorder %s47, %s48
    %p57 = scmp.eq.s32.totalorder %s16, 0
    %p58 = por %p56, %p57
    %p59 = scmp.ne.s32.totalorder %s47, %s48
    %p60 = scmp.eq.s32.totalorder %s17, 1
    %p61 = por %p59, %p60
    %p63 = scmp.ne.s32.totalorder %s48, %s62
    %p64 = scmp.eq.s32.totalorder %s17, 0
    %p65 = por %p63, %p64
    %s67 = sadd.s32 %s66, 1
    %p70 = scmp.eq.s32.totalorder %s11, 1
    %p71 = scmp.ne.s32.totalorder %s66, %s68
    %p72 = scmp.eq.s32.totalorder %s11, 0
    %p73 = por %p71, %p72
    %p74 = scmp.ne.s32.totalorder %s66, %s68
    %p75 = scmp.eq.s32.totalorder %s16, 1
    %p76 = por %p74, %p75
    %p77 = scmp.ne.s32.totalorder %s68, %s69
    %p78 = scmp.eq.s32.totalorder %s16, 0
    %p79 = por %p77, %p78
    %p80 = scmp.ne.s32.totalorder %s68, %s69
    %p81 = scmp.eq.s32.totalorder %s17, 1
    %p82 = por %p80, %p81
    %p84 = scmp.ne.s32.totalorder %s69, %s83
    %p85 = scmp.eq.s32.totalorder %s17, 0
    %p86 = por %p84, %p85
    %s87 = ssub.s32 %s11, %s18
    %p88 = scmp.eq.s32.totalorder %s87, 0
    %s90 = sadd.s32 %s89, 1
    %s91 = scalar_select %p88, %s89, %s90
    %p94 = pneg %p88
    %p95 = scmp.eq.s32.totalorder %s11, 1
    %p96 = por %p94, %p95
    %p97 = scmp.ne.s32.totalorder %s89, %s92
    %p98 = scmp.eq.s32.totalorder %s11, 0
    %p99 = por %p97, %p98
    %p100 = scmp.ne.s32.totalorder %s89, %s92
    %p101 = scmp.eq.s32.totalorder %s16, 1
    %p102 = por %p100, %p101
    %p103 = scmp.ne.s32.totalorder %s92, %s93
    %p104 = scmp.eq.s32.totalorder %s16, 0
    %p105 = por %p103, %p104
    %p106 = scmp.ne.s32.totalorder %s92, %s93
    %p107 = scmp.eq.s32.totalorder %s17, 1
    %p108 = por %p106, %p107
    %p110 = scmp.ne.s32.totalorder %s93, %s109
    %p111 = scmp.eq.s32.totalorder %s17, 0
    %p112 = por %p110, %p111
    %s113 = ssub.s32 %s11, %s18
    %p114 = scmp.eq.s32.totalorder %s113, 0
    %s116 = sadd.s32 %s115, 1
    %s117 = scalar_select %p114, %s115, %s116
    %p120 = pneg %p114
    %p121 = scmp.eq.s32.totalorder %s11, 1
    %p122 = por %p120, %p121
    %p123 = scmp.ne.s32.totalorder %s115, %s118
    %p124 = scmp.eq.s32.totalorder %s11, 0
    %p125 = por %p123, %p124
    %p126 = scmp.ne.s32.totalorder %s115, %s118
    %p127 = scmp.eq.s32.totalorder %s16, 1
    %p128 = por %p126, %p127
    %p129 = scmp.ne.s32.totalorder %s118, %s119
    %p130 = scmp.eq.s32.totalorder %s16, 0
    %p131 = por %p129, %p130
    %p132 = scmp.ne.s32.totalorder %s118, %s119
    %p133 = scmp.eq.s32.totalorder %s17, 1
    %p134 = por %p132, %p133
    %p136 = scmp.ne.s32.totalorder %s119, %s135
    %p137 = scmp.eq.s32.totalorder %s17, 0
    %p138 = por %p136, %p137
    %p139 = scmp.le.s32.totalorder 1, %s11
    %p140 = scmp.lt.s32.totalorder %s11, 3
    %p141 = pnand %p139, %p140
    %p142 = pneg %p141
    // Predicated region
    $region9: #{feature_extractor_forward.1} parent=5 // pred_check
      _
    $region10: #{feature_extractor_forward.1} parent=5 // pred_check_branch
      %144 = sbr.rel (%p141) target = $region12
    $region11: #{feature_extractor_forward.1} parent=5 // pred_region
      %s145 = ssub.s32 %s11, 1
      // Predicated region
      $region13: #{feature_extractor_forward.1} parent=11 // pred_check
        %p146 = pneg %p58
      $region14: #{feature_extractor_forward.1} parent=11 // pred_check_branch
        %148 = sbr.rel (%p146) target = $region16
      $region15: #{feature_extractor_forward.1} parent=11 // pred_region
        _
      $region16: #{feature_extractor_forward.1} parent=11 // pred_fallthru
        _
      // Predicated region
      $region17: #{feature_extractor_forward.1} parent=11 // pred_check
        %p149 = pneg %p79
      $region18: #{feature_extractor_forward.1} parent=11 // pred_check_branch
        %151 = sbr.rel (%p149) target = $region20
      $region19: #{feature_extractor_forward.1} parent=11 // pred_region
        _
      $region20: #{feature_extractor_forward.1} parent=11 // pred_fallthru
        _
    $region12: #{feature_extractor_forward.1} parent=5 // pred_fallthru
      _
    %p152 = scmp.lt.s32.totalorder %s11, 2
    // Predicated region
    $region21: #{feature_extractor_forward.1} parent=5 // pred_check
      %p153 = pneg %p152
    $region22: #{feature_extractor_forward.1} parent=5 // pred_check_branch
      %155 = sbr.rel (%p153) target = $region24
    $region23: #{feature_extractor_forward.1} parent=5 // pred_region
      // Predicated region
      $region25: #{feature_extractor_forward.1} parent=23 // pred_check
        %p156 = pneg %p31
      $region26: #{feature_extractor_forward.1} parent=23 // pred_check_branch
        %158 = sbr.rel (%p156) target = $region28
      $region27: #{feature_extractor_forward.1} parent=23 // pred_region
        %p159 = scmp.lt.s32.totalorder %s11, 1
        %s160 = scalar_select %p159, %s11, 1
        %s161 = smul.addr %s160, 32
        %s162 = smul.addr %s161, 8
        %s163 = scalar_lea.vmem %s0, %s162
      $region28: #{feature_extractor_forward.1} parent=23 // pred_fallthru
        _
    $region24: #{feature_extractor_forward.1} parent=5 // pred_fallthru
      _
    %p164 = scmp.le.s32.totalorder 1, %s11
    %p165 = scmp.lt.s32.totalorder %s11, 3
    %p166 = pnand %p164, %p165
    %p167 = pneg %p166
    // Predicated region
    $region29: #{feature_extractor_forward.1} parent=5 // pred_check
      _
    $region30: #{feature_extractor_forward.1} parent=5 // pred_check_branch
      %169 = sbr.rel (%p166) target = $region32
    $region31: #{feature_extractor_forward.1} parent=5 // pred_region
      %s170 = ssub.s32 %s11, 1
      %p171 = scmp.lt.s32.totalorder %s16, 1
      %s172 = scalar_select %p171, %s16, 1
      %s173 = smul.addr %s172, 32
      %s174 = smul.addr %s173, 8
      %s175 = scalar_lea.vmem %s0, %s174
      %p176 = pneg %p37
      %p177 = pneg %p34
      %p178 = pneg %p58
      %p179 = pneg %p55
      %p180 = pneg %p79
      %p181 = pneg %p76
      %p182 = pneg %p105
      %p183 = pneg %p102
      %p184 = scmp.lt.s32.totalorder %s16, 1
      %s185 = scalar_select %p184, %s16, 1
      %s186 = smul.addr %s185, 2
      %s187 = smul.addr %s186, 8
      %s188 = scalar_lea.vmem %s3, %s187
      %p189 = pneg %p131
      %p190 = pneg %p128
      %p191 = scmp.lt.s32.totalorder %s16, 1
      %s192 = scalar_select %p191, %s16, 1
      %s193 = smul.addr %s192, 8
      %s194 = scalar_lea.vmem %s4, %s193
      %p195 = scmp.lt.s32.totalorder %s16, 1
      %s196 = scalar_select %p195, %s16, 1
      %s197 = smul.addr %s196, 32
      %s198 = smul.addr %s197, 8
      %s199 = scalar_lea.vmem %s0, %s198
      %p200 = scmp.lt.s32.totalorder %s16, 1
      %s201 = scalar_select %p200, %s16, 1
      %s202 = smul.addr %s201, 2
      %s203 = smul.addr %s202, 8
      %s204 = scalar_lea.vmem %s3, %s203
      %p205 = scmp.lt.s32.totalorder %s16, 1
      %s206 = scalar_select %p205, %s16, 1
      %s207 = smul.addr %s206, 8
      %s208 = scalar_lea.vmem %s4, %s207
      %vm209 = vcmask 31744
      %210 = vst.msk [vmem:[#allocation2] sm:$0xff] %vm209, 0.0
      %211 = vst.msk [vmem:[#allocation2 + $0x8] sm:$0xff] %vm209, 0.0
      %212 = vst.msk [vmem:[#allocation2 + $0x10] sm:$0xff] %vm209, 0.0
      %213 = vst.msk [vmem:[#allocation2 + $0x18] sm:$0xff] %vm209, 0.0
      %214 = vst.msk [vmem:[#allocation2 + $0x20] sm:$0xff] %vm209, 0.0
      %215 = vst.msk [vmem:[#allocation2 + $0x28] sm:$0xff] %vm209, 0.0
      %216 = vst.msk [vmem:[#allocation2 + $0x30] sm:$0xff] %vm209, 0.0
      %217 = vst.msk [vmem:[#allocation2 + $0x38] sm:$0xff] %vm209, 0.0
      %218 = vst.msk [vmem:[#allocation2 + $0x40] sm:$0xff] %vm209, 0.0
      %219 = vst.msk [vmem:[#allocation2 + $0x48] sm:$0xff] %vm209, 0.0
      %220 = vst.msk [vmem:[#allocation2 + $0x50] sm:$0xff] %vm209, 0.0
      %221 = vst.msk [vmem:[#allocation2 + $0x58] sm:$0xff] %vm209, 0.0
      %222 = vst.msk [vmem:[#allocation2 + $0x60] sm:$0xff] %vm209, 0.0
      %223 = vst.msk [vmem:[#allocation2 + $0x68] sm:$0xff] %vm209, 0.0
      %224 = vst.msk [vmem:[#allocation2 + $0x70] sm:$0xff] %vm209, 0.0
      %225 = vst.msk [vmem:[#allocation2 + $0x78] sm:$0xff] %vm209, 0.0
      %226 = vst.msk [vmem:[#allocation2 + $0x80] sm:$0xff] %vm209, 0.0
      %227 = vst.msk [vmem:[#allocation2 + $0x88] sm:$0xff] %vm209, 0.0
      %228 = vst.msk [vmem:[#allocation2 + $0x90] sm:$0xff] %vm209, 0.0
      %229 = vst.msk [vmem:[#allocation2 + $0x98] sm:$0xff] %vm209, 0.0
      %230 = vst.msk [vmem:[#allocation2 + $0xa0] sm:$0xff] %vm209, 0.0
      %231 = vst.msk [vmem:[#allocation2 + $0xa8] sm:$0xff] %vm209, 0.0
      %232 = vst.msk [vmem:[#allocation2 + $0xb0] sm:$0xff] %vm209, 0.0
      %233 = vst.msk [vmem:[#allocation2 + $0xb8] sm:$0xff] %vm209, 0.0
      %234 = vst.msk [vmem:[#allocation2 + $0xc0] sm:$0xff] %vm209, 0.0
      %235 = vst.msk [vmem:[#allocation2 + $0xc8] sm:$0xff] %vm209, 0.0
      %236 = vst.msk [vmem:[#allocation2 + $0xd0] sm:$0xff] %vm209, 0.0
      %237 = vst.msk [vmem:[#allocation2 + $0xd8] sm:$0xff] %vm209, 0.0
      %238 = vst.msk [vmem:[#allocation2 + $0xe0] sm:$0xff] %vm209, 0.0
      %239 = vst.msk [vmem:[#allocation2 + $0xe8] sm:$0xff] %vm209, 0.0
      %240 = vst.msk [vmem:[#allocation2 + $0xf0] sm:$0xff] %vm209, 0.0
      %241 = vst.msk [vmem:[#allocation2 + $0xf8] sm:$0xff] %vm209, 0.0
      %242 = vst.msk [vmem:[#allocation2 + $0x100] sm:$0xff] %vm209, 0.0
      %243 = vst.msk [vmem:[#allocation2 + $0x108] sm:$0xff] %vm209, 0.0
      %244 = vst.msk [vmem:[#allocation2 + $0x110] sm:$0xff] %vm209, 0.0
      %245 = vst.msk [vmem:[#allocation2 + $0x118] sm:$0xff] %vm209, 0.0
      %246 = vst.msk [vmem:[#allocation2 + $0x120] sm:$0xff] %vm209, 0.0
      %247 = vst.msk [vmem:[#allocation2 + $0x128] sm:$0xff] %vm209, 0.0
      %248 = vst.msk [vmem:[#allocation2 + $0x130] sm:$0xff] %vm209, 0.0
      %249 = vst.msk [vmem:[#allocation2 + $0x138] sm:$0xff] %vm209, 0.0
      %v250 = vld [vmem:[%s199] sm:$0xff]
      %v251 = vld [vmem:[%s199 + $0x8] sm:$0xff]
      %v252 = vld [vmem:[%s199 + $0x10] sm:$0xff]
      %v253 = vld [vmem:[%s199 + $0x18] sm:$0xff]
      %v254 = vld [vmem:[%s199 + $0x20] sm:$0xff]
      %v255 = vld [vmem:[%s199 + $0x28] sm:$0xff]
      %v256 = vld [vmem:[%s199 + $0x30] sm:$0xff]
      %v257 = vld [vmem:[%s199 + $0x38] sm:$0xff]
      %v258 = vld [vmem:[%s199 + $0x40] sm:$0xff]
      %v259 = vld [vmem:[%s199 + $0x48] sm:$0xff]
      %v260 = vld [vmem:[%s199 + $0x50] sm:$0xff]
      %v261 = vld [vmem:[%s199 + $0x58] sm:$0xff]
      %v262 = vld [vmem:[%s199 + $0x60] sm:$0xff]
      %v263 = vld [vmem:[%s199 + $0x68] sm:$0xff]
      %v264 = vld [vmem:[%s199 + $0x70] sm:$0xff]
      %v265 = vld [vmem:[%s199 + $0x78] sm:$0xff]
      %v266 = vld [vmem:[%s199 + $0x80] sm:$0xff]
      %v267 = vld [vmem:[%s199 + $0x88] sm:$0xff]
      %v268 = vld [vmem:[%s199 + $0x90] sm:$0xff]
      %v269 = vld [vmem:[%s199 + $0x98] sm:$0xff]
      %v270 = vld [vmem:[%s199 + $0xa0] sm:$0xff]
      %v271 = vld [vmem:[%s199 + $0xa8] sm:$0xff]
      %v272 = vld [vmem:[%s199 + $0xb0] sm:$0xff]
      %v273 = vld [vmem:[%s199 + $0xb8] sm:$0xff]
      %v274 = vld [vmem:[%s199 + $0xc0] sm:$0xff]
      %v275 = vld [vmem:[%s199 + $0xc8] sm:$0xff]
      %v276 = vld [vmem:[%s199 + $0xd0] sm:$0xff]
      %v277 = vld [vmem:[%s199 + $0xd8] sm:$0xff]
      %v278 = vld [vmem:[%s199 + $0xe0] sm:$0xff]
      %v279 = vld [vmem:[%s199 + $0xe8] sm:$0xff]
      %v280 = vld [vmem:[%s199 + $0xf0] sm:$0xff]
      %v281 = vld [vmem:[%s199 + $0xf8] sm:$0xff]
      %282 = vst.msk [vmem:[#allocation2 + $0x20] sm:$0xff] %vm209, %v250
      %283 = vst.msk [vmem:[#allocation2 + $0x28] sm:$0xff] %vm209, %v251
      %284 = vst.msk [vmem:[#allocation2 + $0x30] sm:$0xff] %vm209, %v252
      %285 = vst.msk [vmem:[#allocation2 + $0x38] sm:$0xff] %vm209, %v253
      %286 = vst.msk [vmem:[#allocation2 + $0x40] sm:$0xff] %vm209, %v254
      %287 = vst.msk [vmem:[#allocation2 + $0x48] sm:$0xff] %vm209, %v255
      %288 = vst.msk [vmem:[#allocation2 + $0x50] sm:$0xff] %vm209, %v256
      %289 = vst.msk [vmem:[#allocation2 + $0x58] sm:$0xff] %vm209, %v257
      %290 = vst.msk [vmem:[#allocation2 + $0x60] sm:$0xff] %vm209, %v258
      %291 = vst.msk [vmem:[#allocation2 + $0x68] sm:$0xff] %vm209, %v259
      %292 = vst.msk [vmem:[#allocation2 + $0x70] sm:$0xff] %vm209, %v260
      %293 = vst.msk [vmem:[#allocation2 + $0x78] sm:$0xff] %vm209, %v261
      %294 = vst.msk [vmem:[#allocation2 + $0x80] sm:$0xff] %vm209, %v262
      %295 = vst.msk [vmem:[#allocation2 + $0x88] sm:$0xff] %vm209, %v263
      %296 = vst.msk [vmem:[#allocation2 + $0x90] sm:$0xff] %vm209, %v264
      %297 = vst.msk [vmem:[#allocation2 + $0x98] sm:$0xff] %vm209, %v265
      %298 = vst.msk [vmem:[#allocation2 + $0xa0] sm:$0xff] %vm209, %v266
      %299 = vst.msk [vmem:[#allocation2 + $0xa8] sm:$0xff] %vm209, %v267
      %300 = vst.msk [vmem:[#allocation2 + $0xb0] sm:$0xff] %vm209, %v268
      %301 = vst.msk [vmem:[#allocation2 + $0xb8] sm:$0xff] %vm209, %v269
      %302 = vst.msk [vmem:[#allocation2 + $0xc0] sm:$0xff] %vm209, %v270
      %303 = vst.msk [vmem:[#allocation2 + $0xc8] sm:$0xff] %vm209, %v271
      %304 = vst.msk [vmem:[#allocation2 + $0xd0] sm:$0xff] %vm209, %v272
      %305 = vst.msk [vmem:[#allocation2 + $0xd8] sm:$0xff] %vm209, %v273
      %306 = vst.msk [vmem:[#allocation2 + $0xe0] sm:$0xff] %vm209, %v274
      %307 = vst.msk [vmem:[#allocation2 + $0xe8] sm:$0xff] %vm209, %v275
      %308 = vst.msk [vmem:[#allocation2 + $0xf0] sm:$0xff] %vm209, %v276
      %309 = vst.msk [vmem:[#allocation2 + $0xf8] sm:$0xff] %vm209, %v277
      %310 = vst.msk [vmem:[#allocation2 + $0x100] sm:$0xff] %vm209, %v278
      %311 = vst.msk [vmem:[#allocation2 + $0x108] sm:$0xff] %vm209, %v279
      %312 = vst.msk [vmem:[#allocation2 + $0x110] sm:$0xff] %vm209, %v280
      %313 = vst.msk [vmem:[#allocation2 + $0x118] sm:$0xff] %vm209, %v281
      %v314 = vlaneseq
      %v315 = vshrl.u32 %v314, 7
      %v316 = vadd.s32 %v315, 8
      %v317 = vadd.s32 %v315, 16
      %v318 = vadd.s32 %v315, 24
      %v319 = vadd.s32 %v315, 32
      %v320 = vadd.s32 %v315, 40
      %v321 = vadd.s32 %v315, 48
      %v322 = vadd.s32 %v315, 56
      %v323 = vadd.s32 %v315, 64
      %v324 = vadd.s32 %v315, 72
      %v325 = vadd.s32 %v315, 80
      %v326 = vadd.s32 %v315, 88
      %v327 = vadd.s32 %v315, 96
      %v328 = vadd.s32 %v315, 104
      %v329 = vadd.s32 %v315, 112
      %v330 = vadd.s32 %v315, 120
      %v331 = vadd.s32 %v315, 128
      %v332 = vadd.s32 %v315, 136
      %v333 = vadd.s32 %v315, 144
      %v334 = vadd.s32 %v315, 152
      %v335 = vadd.s32 %v315, 160
      %v336 = vadd.s32 %v315, 168
      %v337 = vadd.s32 %v315, 176
      %v338 = vadd.s32 %v315, 184
      %v339 = vadd.s32 %v315, 192
      %v340 = vadd.s32 %v315, 200
      %v341 = vadd.s32 %v315, 208
      %v342 = vadd.s32 %v315, 216
      %v343 = vadd.s32 %v315, 224
      %v344 = vadd.s32 %v315, 232
      %v345 = vadd.s32 %v315, 240
      %v346 = vadd.s32 %v315, 248
      %vm347 = vcmp.lt.s32.totalorder %v315, 0
      %v348 = vsub.s32 0, %v315
      %v349 = vsel %vm347, %v348, %v315
      %v350 = vshrl.u32 %v349, 4
      %v351 = vand.u32 %v349, 15
      %v352 = vsub.s32 0, %v351
      %v353 = vsel %vm347, %v352, %v351
      %vm354 = vcmp.lt.s32.totalorder %v316, 0
      %v355 = vsub.s32 0, %v316
      %v356 = vsel %vm354, %v355, %v316
      %v357 = vshrl.u32 %v356, 4
      %v358 = vand.u32 %v356, 15
      %v359 = vsub.s32 0, %v358
      %v360 = vsel %vm354, %v359, %v358
      %vm361 = vcmp.lt.s32.totalorder %v317, 0
      %v362 = vsub.s32 0, %v317
      %v363 = vsel %vm361, %v362, %v317
      %v364 = vshrl.u32 %v363, 4
      %v365 = vand.u32 %v363, 15
      %v366 = vsub.s32 0, %v365
      %v367 = vsel %vm361, %v366, %v365
      %vm368 = vcmp.lt.s32.totalorder %v318, 0
      %v369 = vsub.s32 0, %v318
      %v370 = vsel %vm368, %v369, %v318
      %v371 = vshrl.u32 %v370, 4
      %v372 = vand.u32 %v370, 15
      %v373 = vsub.s32 0, %v372
      %v374 = vsel %vm368, %v373, %v372
      %vm375 = vcmp.lt.s32.totalorder %v319, 0
      %v376 = vsub.s32 0, %v319
      %v377 = vsel %vm375, %v376, %v319
      %v378 = vshrl.u32 %v377, 4
      %v379 = vand.u32 %v377, 15
      %v380 = vsub.s32 0, %v379
      %v381 = vsel %vm375, %v380, %v379
      %vm382 = vcmp.lt.s32.totalorder %v320, 0
      %v383 = vsub.s32 0, %v320
      %v384 = vsel %vm382, %v383, %v320
      %v385 = vshrl.u32 %v384, 4
      %v386 = vand.u32 %v384, 15
      %v387 = vsub.s32 0, %v386
      %v388 = vsel %vm382, %v387, %v386
      %vm389 = vcmp.lt.s32.totalorder %v321, 0
      %v390 = vsub.s32 0, %v321
      %v391 = vsel %vm389, %v390, %v321
      %v392 = vshrl.u32 %v391, 4
      %v393 = vand.u32 %v391, 15
      %v394 = vsub.s32 0, %v393
      %v395 = vsel %vm389, %v394, %v393
      %vm396 = vcmp.lt.s32.totalorder %v322, 0
      %v397 = vsub.s32 0, %v322
      %v398 = vsel %vm396, %v397, %v322
      %v399 = vshrl.u32 %v398, 4
      %v400 = vand.u32 %v398, 15
      %v401 = vsub.s32 0, %v400
      %v402 = vsel %vm396, %v401, %v400
      %vm403 = vcmp.lt.s32.totalorder %v323, 0
      %v404 = vsub.s32 0, %v323
      %v405 = vsel %vm403, %v404, %v323
      %v406 = vshrl.u32 %v405, 4
      %v407 = vand.u32 %v405, 15
      %v408 = vsub.s32 0, %v407
      %v409 = vsel %vm403, %v408, %v407
      %vm410 = vcmp.lt.s32.totalorder %v324, 0
      %v411 = vsub.s32 0, %v324
      %v412 = vsel %vm410, %v411, %v324
      %v413 = vshrl.u32 %v412, 4
      %v414 = vand.u32 %v412, 15
      %v415 = vsub.s32 0, %v414
      %v416 = vsel %vm410, %v415, %v414
      %vm417 = vcmp.lt.s32.totalorder %v325, 0
      %v418 = vsub.s32 0, %v325
      %v419 = vsel %vm417, %v418, %v325
      %v420 = vshrl.u32 %v419, 4
      %v421 = vand.u32 %v419, 15
      %v422 = vsub.s32 0, %v421
      %v423 = vsel %vm417, %v422, %v421
      %vm424 = vcmp.lt.s32.totalorder %v326, 0
      %v425 = vsub.s32 0, %v326
      %v426 = vsel %vm424, %v425, %v326
      %v427 = vshrl.u32 %v426, 4
      %v428 = vand.u32 %v426, 15
      %v429 = vsub.s32 0, %v428
      %v430 = vsel %vm424, %v429, %v428
      %vm431 = vcmp.lt.s32.totalorder %v327, 0
      %v432 = vsub.s32 0, %v327
      %v433 = vsel %vm431, %v432, %v327
      %v434 = vshrl.u32 %v433, 4
      %v435 = vand.u32 %v433, 15
      %v436 = vsub.s32 0, %v435
      %v437 = vsel %vm431, %v436, %v435
      %vm438 = vcmp.lt.s32.totalorder %v328, 0
      %v439 = vsub.s32 0, %v328
      %v440 = vsel %vm438, %v439, %v328
      %v441 = vshrl.u32 %v440, 4
      %v442 = vand.u32 %v440, 15
      %v443 = vsub.s32 0, %v442
      %v444 = vsel %vm438, %v443, %v442
      %vm445 = vcmp.lt.s32.totalorder %v329, 0
      %v446 = vsub.s32 0, %v329
      %v447 = vsel %vm445, %v446, %v329
      %v448 = vshrl.u32 %v447, 4
      %v449 = vand.u32 %v447, 15
      %v450 = vsub.s32 0, %v449
      %v451 = vsel %vm445, %v450, %v449
      %vm452 = vcmp.lt.s32.totalorder %v330, 0
      %v453 = vsub.s32 0, %v330
      %v454 = vsel %vm452, %v453, %v330
      %v455 = vshrl.u32 %v454, 4
      %v456 = vand.u32 %v454, 15
      %v457 = vsub.s32 0, %v456
      %v458 = vsel %vm452, %v457, %v456
      %vm459 = vcmp.lt.s32.totalorder %v331, 0
      %v460 = vsub.s32 0, %v331
      %v461 = vsel %vm459, %v460, %v331
      %v462 = vshrl.u32 %v461, 4
      %v463 = vand.u32 %v461, 15
      %v464 = vsub.s32 0, %v463
      %v465 = vsel %vm459, %v464, %v463
      %vm466 = vcmp.lt.s32.totalorder %v332, 0
      %v467 = vsub.s32 0, %v332
      %v468 = vsel %vm466, %v467, %v332
      %v469 = vshrl.u32 %v468, 4
      %v470 = vand.u32 %v468, 15
      %v471 = vsub.s32 0, %v470
      %v472 = vsel %vm466, %v471, %v470
      %vm473 = vcmp.lt.s32.totalorder %v333, 0
      %v474 = vsub.s32 0, %v333
      %v475 = vsel %vm473, %v474, %v333
      %v476 = vshrl.u32 %v475, 4
      %v477 = vand.u32 %v475, 15
      %v478 = vsub.s32 0, %v477
      %v479 = vsel %vm473, %v478, %v477
      %vm480 = vcmp.lt.s32.totalorder %v334, 0
      %v481 = vsub.s32 0, %v334
      %v482 = vsel %vm480, %v481, %v334
      %v483 = vshrl.u32 %v482, 4
      %v484 = vand.u32 %v482, 15
      %v485 = vsub.s32 0, %v484
      %v486 = vsel %vm480, %v485, %v484
      %vm487 = vcmp.lt.s32.totalorder %v335, 0
      %v488 = vsub.s32 0, %v335
      %v489 = vsel %vm487, %v488, %v335
      %v490 = vshrl.u32 %v489, 4
      %v491 = vand.u32 %v489, 15
      %v492 = vsub.s32 0, %v491
      %v493 = vsel %vm487, %v492, %v491
      %vm494 = vcmp.lt.s32.totalorder %v336, 0
      %v495 = vsub.s32 0, %v336
      %v496 = vsel %vm494, %v495, %v336
      %v497 = vshrl.u32 %v496, 4
      %v498 = vand.u32 %v496, 15
      %v499 = vsub.s32 0, %v498
      %v500 = vsel %vm494, %v499, %v498
      %vm501 = vcmp.lt.s32.totalorder %v337, 0
      %v502 = vsub.s32 0, %v337
      %v503 = vsel %vm501, %v502, %v337
      %v504 = vshrl.u32 %v503, 4
      %v505 = vand.u32 %v503, 15
      %v506 = vsub.s32 0, %v505
      %v507 = vsel %vm501, %v506, %v505
      %vm508 = vcmp.lt.s32.totalorder %v338, 0
      %v509 = vsub.s32 0, %v338
      %v510 = vsel %vm508, %v509, %v338
      %v511 = vshrl.u32 %v510, 4
      %v512 = vand.u32 %v510, 15
      %v513 = vsub.s32 0, %v512
      %v514 = vsel %vm508, %v513, %v512
      %vm515 = vcmp.lt.s32.totalorder %v339, 0
      %v516 = vsub.s32 0, %v339
      %v517 = vsel %vm515, %v516, %v339
      %v518 = vshrl.u32 %v517, 4
      %v519 = vand.u32 %v517, 15
      %v520 = vsub.s32 0, %v519
      %v521 = vsel %vm515, %v520, %v519
      %vm522 = vcmp.lt.s32.totalorder %v340, 0
      %v523 = vsub.s32 0, %v340
      %v524 = vsel %vm522, %v523, %v340
      %v525 = vshrl.u32 %v524, 4
      %v526 = vand.u32 %v524, 15
      %v527 = vsub.s32 0, %v526
      %v528 = vsel %vm522, %v527, %v526
      %vm529 = vcmp.lt.s32.totalorder %v341, 0
      %v530 = vsub.s32 0, %v341
      %v531 = vsel %vm529, %v530, %v341
      %v532 = vshrl.u32 %v531, 4
      %v533 = vand.u32 %v531, 15
      %v534 = vsub.s32 0, %v533
      %v535 = vsel %vm529, %v534, %v533
      %vm536 = vcmp.lt.s32.totalorder %v342, 0
      %v537 = vsub.s32 0, %v342
      %v538 = vsel %vm536, %v537, %v342
      %v539 = vshrl.u32 %v538, 4
      %v540 = vand.u32 %v538, 15
      %v541 = vsub.s32 0, %v540
      %v542 = vsel %vm536, %v541, %v540
      %vm543 = vcmp.lt.s32.totalorder %v343, 0
      %v544 = vsub.s32 0, %v343
      %v545 = vsel %vm543, %v544, %v343
      %v546 = vshrl.u32 %v545, 4
      %v547 = vand.u32 %v545, 15
      %v548 = vsub.s32 0, %v547
      %v549 = vsel %vm543, %v548, %v547
      %vm550 = vcmp.lt.s32.totalorder %v344, 0
      %v551 = vsub.s32 0, %v344
      %v552 = vsel %vm550, %v551, %v344
      %v553 = vshrl.u32 %v552, 4
      %v554 = vand.u32 %v552, 15
      %v555 = vsub.s32 0, %v554
      %v556 = vsel %vm550, %v555, %v554
      %vm557 = vcmp.lt.s32.totalorder %v345, 0
      %v558 = vsub.s32 0, %v345
      %v559 = vsel %vm557, %v558, %v345
      %v560 = vshrl.u32 %v559, 4
      %v561 = vand.u32 %v559, 15
      %v562 = vsub.s32 0, %v561
      %v563 = vsel %vm557, %v562, %v561
      %vm564 = vcmp.lt.s32.totalorder %v346, 0
      %v565 = vsub.s32 0, %v346
      %v566 = vsel %vm564, %v565, %v346
      %v567 = vshrl.u32 %v566, 4
      %v568 = vand.u32 %v566, 15
      %v569 = vsub.s32 0, %v568
      %v570 = vsel %vm564, %v569, %v568
      %vm571 = vcmp.ne.s32.totalorder %v353, 0
      %vm572 = vcmp.ne.s32.totalorder %v360, 0
      %vm573 = vcmp.ne.s32.totalorder %v367, 0
      %vm574 = vcmp.ne.s32.totalorder %v374, 0
      %vm575 = vcmp.ne.s32.totalorder %v381, 0
      %vm576 = vcmp.ne.s32.totalorder %v388, 0
      %vm577 = vcmp.ne.s32.totalorder %v395, 0
      %vm578 = vcmp.ne.s32.totalorder %v402, 0
      %vm579 = vcmp.ne.s32.totalorder %v409, 0
      %vm580 = vcmp.ne.s32.totalorder %v416, 0
      %vm581 = vcmp.ne.s32.totalorder %v423, 0
      %vm582 = vcmp.ne.s32.totalorder %v430, 0
      %vm583 = vcmp.ne.s32.totalorder %v437, 0
      %vm584 = vcmp.ne.s32.totalorder %v444, 0
      %vm585 = vcmp.ne.s32.totalorder %v451, 0
      %vm586 = vcmp.ne.s32.totalorder %v458, 0
      %vm587 = vcmp.ne.s32.totalorder %v465, 0
      %vm588 = vcmp.ne.s32.totalorder %v472, 0
      %vm589 = vcmp.ne.s32.totalorder %v479, 0
      %vm590 = vcmp.ne.s32.totalorder %v486, 0
      %vm591 = vcmp.ne.s32.totalorder %v493, 0
      %vm592 = vcmp.ne.s32.totalorder %v500, 0
      %vm593 = vcmp.ne.s32.totalorder %v507, 0
      %vm594 = vcmp.ne.s32.totalorder %v514, 0
      %vm595 = vcmp.ne.s32.totalorder %v521, 0
      %vm596 = vcmp.ne.s32.totalorder %v528, 0
      %vm597 = vcmp.ne.s32.totalorder %v535, 0
      %vm598 = vcmp.ne.s32.totalorder %v542, 0
      %vm599 = vcmp.ne.s32.totalorder %v549, 0
      %vm600 = vcmp.ne.s32.totalorder %v556, 0
      %vm601 = vcmp.ne.s32.totalorder %v563, 0
      %vm602 = vcmp.ne.s32.totalorder %v570, 0
      %vm603 = vcmp.lt.s32.totalorder %v353, 0
      %vm604 = vcmp.lt.s32.totalorder %v360, 0
      %vm605 = vcmp.lt.s32.totalorder %v367, 0
      %vm606 = vcmp.lt.s32.totalorder %v374, 0
      %vm607 = vcmp.lt.s32.totalorder %v381, 0
      %vm608 = vcmp.lt.s32.totalorder %v388, 0
      %vm609 = vcmp.lt.s32.totalorder %v395, 0
      %vm610 = vcmp.lt.s32.totalorder %v402, 0
      %vm611 = vcmp.lt.s32.totalorder %v409, 0
      %vm612 = vcmp.lt.s32.totalorder %v416, 0
      %vm613 = vcmp.lt.s32.totalorder %v423, 0
      %vm614 = vcmp.lt.s32.totalorder %v430, 0
      %vm615 = vcmp.lt.s32.totalorder %v437, 0
      %vm616 = vcmp.lt.s32.totalorder %v444, 0
      %vm617 = vcmp.lt.s32.totalorder %v451, 0
      %vm618 = vcmp.lt.s32.totalorder %v458, 0
      %vm619 = vcmp.lt.s32.totalorder %v465, 0
      %vm620 = vcmp.lt.s32.totalorder %v472, 0
      %vm621 = vcmp.lt.s32.totalorder %v479, 0
      %vm622 = vcmp.lt.s32.totalorder %v486, 0
      %vm623 = vcmp.lt.s32.totalorder %v493, 0
      %vm624 = vcmp.lt.s32.totalorder %v500, 0
      %vm625 = vcmp.lt.s32.totalorder %v507, 0
      %vm626 = vcmp.lt.s32.totalorder %v514, 0
      %vm627 = vcmp.lt.s32.totalorder %v521, 0
      %vm628 = vcmp.lt.s32.totalorder %v528, 0
      %vm629 = vcmp.lt.s32.totalorder %v535, 0
      %vm630 = vcmp.lt.s32.totalorder %v542, 0
      %vm631 = vcmp.lt.s32.totalorder %v549, 0
      %vm632 = vcmp.lt.s32.totalorder %v556, 0
      %vm633 = vcmp.lt.s32.totalorder %v563, 0
      %vm634 = vcmp.lt.s32.totalorder %v570, 0
      %vm635 = vmand %vm603, %vm571
      %vm636 = vmand %vm604, %vm572
      %vm637 = vmand %vm605, %vm573
      %vm638 = vmand %vm606, %vm574
      %vm639 = vmand %vm607, %vm575
      %vm640 = vmand %vm608, %vm576
      %vm641 = vmand %vm609, %vm577
      %vm642 = vmand %vm610, %vm578
      %vm643 = vmand %vm611, %vm579
      %vm644 = vmand %vm612, %vm580
      %vm645 = vmand %vm613, %vm581
      %vm646 = vmand %vm614, %vm582
      %vm647 = vmand %vm615, %vm583
      %vm648 = vmand %vm616, %vm584
      %vm649 = vmand %vm617, %vm585
      %vm650 = vmand %vm618, %vm586
      %vm651 = vmand %vm619, %vm587
      %vm652 = vmand %vm620, %vm588
      %vm653 = vmand %vm621, %vm589
      %vm654 = vmand %vm622, %vm590
      %vm655 = vmand %vm623, %vm591
      %vm656 = vmand %vm624, %vm592
      %vm657 = vmand %vm625, %vm593
      %vm658 = vmand %vm626, %vm594
      %vm659 = vmand %vm627, %vm595
      %vm660 = vmand %vm628, %vm596
      %vm661 = vmand %vm629, %vm597
      %vm662 = vmand %vm630, %vm598
      %vm663 = vmand %vm631, %vm599
      %vm664 = vmand %vm632, %vm600
      %vm665 = vmand %vm633, %vm601
      %vm666 = vmand %vm634, %vm602
      %v667 = vadd.s32 %v353, 16
      %v668 = vadd.s32 %v360, 16
      %v669 = vadd.s32 %v367, 16
      %v670 = vadd.s32 %v374, 16
      %v671 = vadd.s32 %v381, 16
      %v672 = vadd.s32 %v388, 16
      %v673 = vadd.s32 %v395, 16
      %v674 = vadd.s32 %v402, 16
      %v675 = vadd.s32 %v409, 16
      %v676 = vadd.s32 %v416, 16
      %v677 = vadd.s32 %v423, 16
      %v678 = vadd.s32 %v430, 16
      %v679 = vadd.s32 %v437, 16
      %v680 = vadd.s32 %v444, 16
      %v681 = vadd.s32 %v451, 16
      %v682 = vadd.s32 %v458, 16
      %v683 = vadd.s32 %v465, 16
      %v684 = vadd.s32 %v472, 16
      %v685 = vadd.s32 %v479, 16
      %v686 = vadd.s32 %v486, 16
      %v687 = vadd.s32 %v493, 16
      %v688 = vadd.s32 %v500, 16
      %v689 = vadd.s32 %v507, 16
      %v690 = vadd.s32 %v514, 16
      %v691 = vadd.s32 %v521, 16
      %v692 = vadd.s32 %v528, 16
      %v693 = vadd.s32 %v535, 16
      %v694 = vadd.s32 %v542, 16
      %v695 = vadd.s32 %v549, 16
      %v696 = vadd.s32 %v556, 16
      %v697 = vadd.s32 %v563, 16
      %v698 = vadd.s32 %v570, 16
      %v699 = vsel %vm635, %v667, %v353
      %v700 = vsel %vm636, %v668, %v360
      %v701 = vsel %vm637, %v669, %v367
      %v702 = vsel %vm638, %v670, %v374
      %v703 = vsel %vm639, %v671, %v381
      %v704 = vsel %vm640, %v672, %v388
      %v705 = vsel %vm641, %v673, %v395
      %v706 = vsel %vm642, %v674, %v402
      %v707 = vsel %vm643, %v675, %v409
      %v708 = vsel %vm644, %v676, %v416
      %v709 = vsel %vm645, %v677, %v423
      %v710 = vsel %vm646, %v678, %v430
      %v711 = vsel %vm647, %v679, %v437
      %v712 = vsel %vm648, %v680, %v444
      %v713 = vsel %vm649, %v681, %v451
      %v714 = vsel %vm650, %v682, %v458
      %v715 = vsel %vm651, %v683, %v465
      %v716 = vsel %vm652, %v684, %v472
      %v717 = vsel %vm653, %v685, %v479
      %v718 = vsel %vm654, %v686, %v486
      %v719 = vsel %vm655, %v687, %v493
      %v720 = vsel %vm656, %v688, %v500
      %v721 = vsel %vm657, %v689, %v507
      %v722 = vsel %vm658, %v690, %v514
      %v723 = vsel %vm659, %v691, %v521
      %v724 = vsel %vm660, %v692, %v528
      %v725 = vsel %vm661, %v693, %v535
      %v726 = vsel %vm662, %v694, %v542
      %v727 = vsel %vm663, %v695, %v549
      %v728 = vsel %vm664, %v696, %v556
      %v729 = vsel %vm665, %v697, %v563
      %v730 = vsel %vm666, %v698, %v570
      %vm731 = vcmp.ne.s32.totalorder %v699, 0
      %vm732 = vcmp.ne.s32.totalorder %v700, 0
      %vm733 = vcmp.ne.s32.totalorder %v701, 0
      %vm734 = vcmp.ne.s32.totalorder %v702, 0
      %vm735 = vcmp.ne.s32.totalorder %v703, 0
      %vm736 = vcmp.ne.s32.totalorder %v704, 0
      %vm737 = vcmp.ne.s32.totalorder %v705, 0
      %vm738 = vcmp.ne.s32.totalorder %v706, 0
      %vm739 = vcmp.ne.s32.totalorder %v707, 0
      %vm740 = vcmp.ne.s32.totalorder %v708, 0
      %vm741 = vcmp.ne.s32.totalorder %v709, 0
      %vm742 = vcmp.ne.s32.totalorder %v710, 0
      %vm743 = vcmp.ne.s32.totalorder %v711, 0
      %vm744 = vcmp.ne.s32.totalorder %v712, 0
      %vm745 = vcmp.ne.s32.totalorder %v713, 0
      %vm746 = vcmp.ne.s32.totalorder %v714, 0
      %vm747 = vcmp.ne.s32.totalorder %v715, 0
      %vm748 = vcmp.ne.s32.totalorder %v716, 0
      %vm749 = vcmp.ne.s32.totalorder %v717, 0
      %vm750 = vcmp.ne.s32.totalorder %v718, 0
      %vm751 = vcmp.ne.s32.totalorder %v719, 0
      %vm752 = vcmp.ne.s32.totalorder %v720, 0
      %vm753 = vcmp.ne.s32.totalorder %v721, 0
      %vm754 = vcmp.ne.s32.totalorder %v722, 0
      %vm755 = vcmp.ne.s32.totalorder %v723, 0
      %vm756 = vcmp.ne.s32.totalorder %v724, 0
      %vm757 = vcmp.ne.s32.totalorder %v725, 0
      %vm758 = vcmp.ne.s32.totalorder %v726, 0
      %vm759 = vcmp.ne.s32.totalorder %v727, 0
      %vm760 = vcmp.ne.s32.totalorder %v728, 0
      %vm761 = vcmp.ne.s32.totalorder %v729, 0
      %vm762 = vcmp.ne.s32.totalorder %v730, 0
      %vm763 = vcmp.ne.s32.totalorder %v699, 15
      %vm764 = vcmp.ne.s32.totalorder %v700, 15
      %vm765 = vcmp.ne.s32.totalorder %v701, 15
      %vm766 = vcmp.ne.s32.totalorder %v702, 15
      %vm767 = vcmp.ne.s32.totalorder %v703, 15
      %vm768 = vcmp.ne.s32.totalorder %v704, 15
      %vm769 = vcmp.ne.s32.totalorder %v705, 15
      %vm770 = vcmp.ne.s32.totalorder %v706, 15
      %vm771 = vcmp.ne.s32.totalorder %v707, 15
      %vm772 = vcmp.ne.s32.totalorder %v708, 15
      %vm773 = vcmp.ne.s32.totalorder %v709, 15
      %vm774 = vcmp.ne.s32.totalorder %v710, 15
      %vm775 = vcmp.ne.s32.totalorder %v711, 15
      %vm776 = vcmp.ne.s32.totalorder %v712, 15
      %vm777 = vcmp.ne.s32.totalorder %v713, 15
      %vm778 = vcmp.ne.s32.totalorder %v714, 15
      %vm779 = vcmp.ne.s32.totalorder %v715, 15
      %vm780 = vcmp.ne.s32.totalorder %v716, 15
      %vm781 = vcmp.ne.s32.totalorder %v717, 15
      %vm782 = vcmp.ne.s32.totalorder %v718, 15
      %vm783 = vcmp.ne.s32.totalorder %v719, 15
      %vm784 = vcmp.ne.s32.totalorder %v720, 15
      %vm785 = vcmp.ne.s32.totalorder %v721, 15
      %vm786 = vcmp.ne.s32.totalorder %v722, 15
      %vm787 = vcmp.ne.s32.totalorder %v723, 15
      %vm788 = vcmp.ne.s32.totalorder %v724, 15
      %vm789 = vcmp.ne.s32.totalorder %v725, 15
      %vm790 = vcmp.ne.s32.totalorder %v726, 15
      %vm791 = vcmp.ne.s32.totalorder %v727, 15
      %vm792 = vcmp.ne.s32.totalorder %v728, 15
      %vm793 = vcmp.ne.s32.totalorder %v729, 15
      %vm794 = vcmp.ne.s32.totalorder %v730, 15
      %v795 = vld [vmem:[#allocation2 + $0xf] sm:$0xff]
      %v796 = vld [vmem:[#allocation2 + $0x17] sm:$0xff]
      %v797 = vld [vmem:[#allocation2 + $0x1f] sm:$0xff]
      %v798 = vld [vmem:[#allocation2 + $0x27] sm:$0xff]
      %v799 = vld [vmem:[#allocation2 + $0x2f] sm:$0xff]
      %v800 = vld [vmem:[#allocation2 + $0x37] sm:$0xff]
      %v801 = vld [vmem:[#allocation2 + $0x3f] sm:$0xff]
      %v802 = vld [vmem:[#allocation2 + $0x47] sm:$0xff]
      %v803 = vld [vmem:[#allocation2 + $0x4f] sm:$0xff]
      %v804 = vld [vmem:[#allocation2 + $0x57] sm:$0xff]
      %v805 = vld [vmem:[#allocation2 + $0x5f] sm:$0xff]
      %v806 = vld [vmem:[#allocation2 + $0x67] sm:$0xff]
      %v807 = vld [vmem:[#allocation2 + $0x6f] sm:$0xff]
      %v808 = vld [vmem:[#allocation2 + $0x77] sm:$0xff]
      %v809 = vld [vmem:[#allocation2 + $0x7f] sm:$0xff]
      %v810 = vld [vmem:[#allocation2 + $0x87] sm:$0xff]
      %v811 = vld [vmem:[#allocation2 + $0x8f] sm:$0xff]
      %v812 = vld [vmem:[#allocation2 + $0x97] sm:$0xff]
      %v813 = vld [vmem:[#allocation2 + $0x9f] sm:$0xff]
      %v814 = vld [vmem:[#allocation2 + $0xa7] sm:$0xff]
      %v815 = vld [vmem:[#allocation2 + $0xaf] sm:$0xff]
      %v816 = vld [vmem:[#allocation2 + $0xb7] sm:$0xff]
      %v817 = vld [vmem:[#allocation2 + $0xbf] sm:$0xff]
      %v818 = vld [vmem:[#allocation2 + $0xc7] sm:$0xff]
      %v819 = vld [vmem:[#allocation2 + $0xcf] sm:$0xff]
      %v820 = vld [vmem:[#allocation2 + $0xd7] sm:$0xff]
      %v821 = vld [vmem:[#allocation2 + $0xdf] sm:$0xff]
      %v822 = vld [vmem:[#allocation2 + $0xe7] sm:$0xff]
      %v823 = vld [vmem:[#allocation2 + $0xef] sm:$0xff]
      %v824 = vld [vmem:[#allocation2 + $0xf7] sm:$0xff]
      %v825 = vld [vmem:[#allocation2 + $0xff] sm:$0xff]
      %v826 = vld [vmem:[#allocation2 + $0x107] sm:$0xff]
      %v827 = vsel %vm731, 1, 0
      %v828 = vsel %vm732, 1, 0
      %v829 = vsel %vm733, 1, 0
      %v830 = vsel %vm734, 1, 0
      %v831 = vsel %vm735, 1, 0
      %v832 = vsel %vm736, 1, 0
      %v833 = vsel %vm737, 1, 0
      %v834 = vsel %vm738, 1, 0
      %v835 = vsel %vm739, 1, 0
      %v836 = vsel %vm740, 1, 0
      %v837 = vsel %vm741, 1, 0
      %v838 = vsel %vm742, 1, 0
      %v839 = vsel %vm743, 1, 0
      %v840 = vsel %vm744, 1, 0
      %v841 = vsel %vm745, 1, 0
      %v842 = vsel %vm746, 1, 0
      %v843 = vsel %vm747, 1, 0
      %v844 = vsel %vm748, 1, 0
      %v845 = vsel %vm749, 1, 0
      %v846 = vsel %vm750, 1, 0
      %v847 = vsel %vm751, 1, 0
      %v848 = vsel %vm752, 1, 0
      %v849 = vsel %vm753, 1, 0
      %v850 = vsel %vm754, 1, 0
      %v851 = vsel %vm755, 1, 0
      %v852 = vsel %vm756, 1, 0
      %v853 = vsel %vm757, 1, 0
      %v854 = vsel %vm758, 1, 0
      %v855 = vsel %vm759, 1, 0
      %v856 = vsel %vm760, 1, 0
      %v857 = vsel %vm761, 1, 0
      %v858 = vsel %vm762, 1, 0
      %vm859 = vcmp.eq.s32.totalorder %v827, 1
      %vm860 = vcmp.eq.s32.totalorder %v828, 1
      %vm861 = vcmp.eq.s32.totalorder %v829, 1
      %vm862 = vcmp.eq.s32.totalorder %v830, 1
      %vm863 = vcmp.eq.s32.totalorder %v831, 1
      %vm864 = vcmp.eq.s32.totalorder %v832, 1
      %vm865 = vcmp.eq.s32.totalorder %v833, 1
      %vm866 = vcmp.eq.s32.totalorder %v834, 1
      %vm867 = vcmp.eq.s32.totalorder %v835, 1
      %vm868 = vcmp.eq.s32.totalorder %v836, 1
      %vm869 = vcmp.eq.s32.totalorder %v837, 1
      %vm870 = vcmp.eq.s32.totalorder %v838, 1
      %vm871 = vcmp.eq.s32.totalorder %v839, 1
      %vm872 = vcmp.eq.s32.totalorder %v840, 1
      %vm873 = vcmp.eq.s32.totalorder %v841, 1
      %vm874 = vcmp.eq.s32.totalorder %v842, 1
      %vm875 = vcmp.eq.s32.totalorder %v843, 1
      %vm876 = vcmp.eq.s32.totalorder %v844, 1
      %vm877 = vcmp.eq.s32.totalorder %v845, 1
      %vm878 = vcmp.eq.s32.totalorder %v846, 1
      %vm879 = vcmp.eq.s32.totalorder %v847, 1
      %vm880 = vcmp.eq.s32.totalorder %v848, 1
      %vm881 = vcmp.eq.s32.totalorder %v849, 1
      %vm882 = vcmp.eq.s32.totalorder %v850, 1
      %vm883 = vcmp.eq.s32.totalorder %v851, 1
      %vm884 = vcmp.eq.s32.totalorder %v852, 1
      %vm885 = vcmp.eq.s32.totalorder %v853, 1
      %vm886 = vcmp.eq.s32.totalorder %v854, 1
      %vm887 = vcmp.eq.s32.totalorder %v855, 1
      %vm888 = vcmp.eq.s32.totalorder %v856, 1
      %vm889 = vcmp.eq.s32.totalorder %v857, 1
      %vm890 = vcmp.eq.s32.totalorder %v858, 1
      %v891 = vsel %vm859, %v795, 0.0
      %v892 = vsel %vm860, %v796, 0.0
      %v893 = vsel %vm861, %v797, 0.0
      %v894 = vsel %vm862, %v798, 0.0
      %v895 = vsel %vm863, %v799, 0.0
      %v896 = vsel %vm864, %v800, 0.0
      %v897 = vsel %vm865, %v801, 0.0
      %v898 = vsel %vm866, %v802, 0.0
      %v899 = vsel %vm867, %v803, 0.0
      %v900 = vsel %vm868, %v804, 0.0
      %v901 = vsel %vm869, %v805, 0.0
      %v902 = vsel %vm870, %v806, 0.0
      %v903 = vsel %vm871, %v807, 0.0
      %v904 = vsel %vm872, %v808, 0.0
      %v905 = vsel %vm873, %v809, 0.0
      %v906 = vsel %vm874, %v810, 0.0
      %v907 = vsel %vm875, %v811, 0.0
      %v908 = vsel %vm876, %v812, 0.0
      %v909 = vsel %vm877, %v813, 0.0
      %v910 = vsel %vm878, %v814, 0.0
      %v911 = vsel %vm879, %v815, 0.0
      %v912 = vsel %vm880, %v816, 0.0
      %v913 = vsel %vm881, %v817, 0.0
      %v914 = vsel %vm882, %v818, 0.0
      %v915 = vsel %vm883, %v819, 0.0
      %v916 = vsel %vm884, %v820, 0.0
      %v917 = vsel %vm885, %v821, 0.0
      %v918 = vsel %vm886, %v822, 0.0
      %v919 = vsel %vm887, %v823, 0.0
      %v920 = vsel %vm888, %v824, 0.0
      %v921 = vsel %vm889, %v825, 0.0
      %v922 = vsel %vm890, %v826, 0.0
      %v923 = vld [vmem:[%s1] sm:$0xff]
      %v924 = vld [vmem:[#allocation2 + $0x10] sm:$0xff]
      %v925 = vld [vmem:[#allocation2 + $0x18] sm:$0xff]
      %v926 = vld [vmem:[#allocation2 + $0x20] sm:$0xff]
      %v927 = vld [vmem:[#allocation2 + $0x28] sm:$0xff]
      %v928 = vld [vmem:[#allocation2 + $0x30] sm:$0xff]
      %v929 = vld [vmem:[#allocation2 + $0x38] sm:$0xff]
      %v930 = vld [vmem:[#allocation2 + $0x40] sm:$0xff]
      %v931 = vld [vmem:[#allocation2 + $0x48] sm:$0xff]
      %v932 = vld [vmem:[#allocation2 + $0x50] sm:$0xff]
      %v933 = vld [vmem:[#allocation2 + $0x58] sm:$0xff]
      %v934 = vld [vmem:[#allocation2 + $0x60] sm:$0xff]
      %v935 = vld [vmem:[#allocation2 + $0x68] sm:$0xff]
      %v936 = vld [vmem:[#allocation2 + $0x70] sm:$0xff]
      %v937 = vld [vmem:[#allocation2 + $0x78] sm:$0xff]
      %v938 = vld [vmem:[#allocation2 + $0x80] sm:$0xff]
      %v939 = vld [vmem:[#allocation2 + $0x88] sm:$0xff]
      %v940 = vld [vmem:[#allocation2 + $0x90] sm:$0xff]
      %v941 = vld [vmem:[#allocation2 + $0x98] sm:$0xff]
      %v942 = vld [vmem:[#allocation2 + $0xa0] sm:$0xff]
      %v943 = vld [vmem:[#allocation2 + $0xa8] sm:$0xff]
      %v944 = vld [vmem:[#allocation2 + $0xb0] sm:$0xff]
      %v945 = vld [vmem:[#allocation2 + $0xb8] sm:$0xff]
      %v946 = vld [vmem:[#allocation2 + $0xc0] sm:$0xff]
      %v947 = vld [vmem:[#allocation2 + $0xc8] sm:$0xff]
      %v948 = vld [vmem:[#allocation2 + $0xd0] sm:$0xff]
      %v949 = vld [vmem:[#allocation2 + $0xd8] sm:$0xff]
      %v950 = vld [vmem:[#allocation2 + $0xe0] sm:$0xff]
      %v951 = vld [vmem:[#allocation2 + $0xe8] sm:$0xff]
      %v952 = vld [vmem:[#allocation2 + $0xf0] sm:$0xff]
      %v953 = vld [vmem:[#allocation2 + $0xf8] sm:$0xff]
      %v954 = vld [vmem:[#allocation2 + $0x100] sm:$0xff]
      %v955 = vld [vmem:[#allocation2 + $0x108] sm:$0xff]
      %s956 = scalar_lea.vmem %s1, 8
      %v957 = vld [vmem:[%s956] sm:$0xff]
      %v959 = vsel %vm209, %v957, 0
      %v962 = vsel %vm209, %v924, 0
      %v965 = vsel %vm209, %v925, 0
      %v968 = vsel %vm209, %v926, 0
      %v971 = vsel %vm209, %v927, 0
      %v974 = vsel %vm209, %v928, 0
      %v977 = vsel %vm209, %v929, 0
      %v980 = vsel %vm209, %v930, 0
      %v983 = vsel %vm209, %v931, 0
      %v986 = vsel %vm209, %v932, 0
      %v989 = vsel %vm209, %v933, 0
      %v992 = vsel %vm209, %v934, 0
      %v995 = vsel %vm209, %v935, 0
      %v998 = vsel %vm209, %v936, 0
      %v1001 = vsel %vm209, %v937, 0
      %v1004 = vsel %vm209, %v938, 0
      %v1007 = vsel %vm209, %v939, 0
      %v1010 = vsel %vm209, %v940, 0
      %v1013 = vsel %vm209, %v941, 0
      %v1016 = vsel %vm209, %v942, 0
      %v1019 = vsel %vm209, %v943, 0
      %v1022 = vsel %vm209, %v944, 0
      %v1025 = vsel %vm209, %v945, 0
      %v1028 = vsel %vm209, %v946, 0
      %v1031 = vsel %vm209, %v947, 0
      %v1034 = vsel %vm209, %v948, 0
      %v1037 = vsel %vm209, %v949, 0
      %v1040 = vsel %vm209, %v950, 0
      %v1043 = vsel %vm209, %v951, 0
      %v1046 = vsel %vm209, %v952, 0
      %v1049 = vsel %vm209, %v953, 0
      %v1052 = vsel %vm209, %v954, 0
      %v1055 = vsel %vm209, %v955, 0
      %1057 = vmatprep.subr.mxu0 0.0
      %1058 = vmatpush1.xpose.msra.mxu0 %v962
      %1059 = vmatprep.subr.mxu0 0.0
      %1060 = vmatpush1.xpose.msra.mxu0 %v965
      %1061 = vmatprep.subr.mxu0 0.0
      %1062 = vmatpush1.xpose.msra.mxu0 %v968
      %1063 = vmatprep.subr.mxu0 0.0
      %1064 = vmatpush1.xpose.msra.mxu0 %v971
      %1065 = vmatprep.subr.mxu0 0.0
      %1066 = vmatpush1.xpose.msra.mxu0 %v974
      %1067 = vmatprep.subr.mxu0 0.0
      %1068 = vmatpush1.xpose.msra.mxu0 %v977
      %1069 = vmatprep.subr.mxu0 0.0
      %1070 = vmatpush1.xpose.msra.mxu0 %v980
      %1071 = vmatprep.subr.mxu0 0.0
      %1072 = vmatpush1.xpose.msra.mxu0 %v983
      %1073 = vmatprep.subr.mxu0 0.0
      %1074 = vmatpush1.xpose.msra.mxu0 %v986
      %1075 = vmatprep.subr.mxu0 0.0
      %1076 = vmatpush1.xpose.msra.mxu0 %v989
      %1077 = vmatprep.subr.mxu0 0.0
      %1078 = vmatpush1.xpose.msra.mxu0 %v992
      %1079 = vmatprep.subr.mxu0 0.0
      %1080 = vmatpush1.xpose.msra.mxu0 %v995
      %1081 = vmatprep.subr.mxu0 0.0
      %1082 = vmatpush1.xpose.msra.mxu0 %v998
      %1083 = vmatprep.subr.mxu0 0.0
      %1084 = vmatpush1.xpose.msra.mxu0 %v1001
      %1085 = vmatprep.subr.mxu0 0.0
      %1086 = vmatpush1.xpose.msra.mxu0 %v1004
      %1087 = vmatprep.subr.mxu0 0.0
      %1088 = vmatpush1.xpose.msra.mxu0 %v1007
      %1089 = vmatprep.subr.mxu0 0.0
      %1090 = vmatpush1.xpose.msra.mxu0 %v1010
      %1091 = vmatprep.subr.mxu0 0.0
      %1092 = vmatpush1.xpose.msra.mxu0 %v1013
      %1093 = vmatprep.subr.mxu0 0.0
      %1094 = vmatpush1.xpose.msra.mxu0 %v1016
      %1095 = vmatprep.subr.mxu0 0.0
      %1096 = vmatpush1.xpose.msra.mxu0 %v1019
      %1097 = vmatprep.subr.mxu0 0.0
      %1098 = vmatpush1.xpose.msra.mxu0 %v1022
      %1099 = vmatprep.subr.mxu0 0.0
      %1100 = vmatpush1.xpose.msra.mxu0 %v1025
      %1101 = vmatprep.subr.mxu0 0.0
      %1102 = vmatpush1.xpose.msra.mxu0 %v1028
      %1103 = vmatprep.subr.mxu0 0.0
      %1104 = vmatpush1.xpose.msra.mxu0 %v1031
      %1105 = vmatprep.subr.mxu0 0.0
      %1106 = vmatpush1.xpose.msra.mxu0 %v1034
      %1107 = vmatprep.subr.mxu0 0.0
      %1108 = vmatpush1.xpose.msra.mxu0 %v1037
      %1109 = vmatprep.subr.mxu0 0.0
      %1110 = vmatpush1.xpose.msra.mxu0 %v1040
      %1111 = vmatprep.subr.mxu0 0.0
      %1112 = vmatpush1.xpose.msra.mxu0 %v1043
      %1113 = vmatprep.subr.mxu0 0.0
      %1114 = vmatpush1.xpose.msra.mxu0 %v1046
      %1115 = vmatprep.subr.mxu0 0.0
      %1116 = vmatpush1.xpose.msra.mxu0 %v1049
      %1117 = vmatprep.subr.mxu0 0.0
      %1118 = vmatpush1.xpose.msra.mxu0 %v1052
      %1119 = vmatprep.subr.mxu0 0.0
      %1120 = vmatpush1.xpose.msra.mxu0 %v1055
      %1121 = vmatprep.mubr.f32.mxu0 0.0
      %1122 = vmatmul.mubr.f32.gmra.mrb[0].mxu0 %v959
      %v1123 = vpop.f32.mrb[0].mxu0
      %v1124 = vadd.f32 0.0, %v1123
      %v1125 = vpop.f32.mrb[0].mxu0
      %v1126 = vadd.f32 0.0, %v1125
      %1127 = vdwg.mxu0
      %v1129 = vsel %vm209, %v923, 0
      %v1132 = vsel %vm209, %v891, 0
      %v1135 = vsel %vm209, %v892, 0
      %v1138 = vsel %vm209, %v893, 0
      %v1141 = vsel %vm209, %v894, 0
      %v1144 = vsel %vm209, %v895, 0
      %v1147 = vsel %vm209, %v896, 0
      %v1150 = vsel %vm209, %v897, 0
      %v1153 = vsel %vm209, %v898, 0
      %v1156 = vsel %vm209, %v899, 0
      %v1159 = vsel %vm209, %v900, 0
      %v1162 = vsel %vm209, %v901, 0
      %v1165 = vsel %vm209, %v902, 0
      %v1168 = vsel %vm209, %v903, 0
      %v1171 = vsel %vm209, %v904, 0
      %v1174 = vsel %vm209, %v905, 0
      %v1177 = vsel %vm209, %v906, 0
      %v1180 = vsel %vm209, %v907, 0
      %v1183 = vsel %vm209, %v908, 0
      %v1186 = vsel %vm209, %v909, 0
      %v1189 = vsel %vm209, %v910, 0
      %v1192 = vsel %vm209, %v911, 0
      %v1195 = vsel %vm209, %v912, 0
      %v1198 = vsel %vm209, %v913, 0
      %v1201 = vsel %vm209, %v914, 0
      %v1204 = vsel %vm209, %v915, 0
      %v1207 = vsel %vm209, %v916, 0
      %v1210 = vsel %vm209, %v917, 0
      %v1213 = vsel %vm209, %v918, 0
      %v1216 = vsel %vm209, %v919, 0
      %v1219 = vsel %vm209, %v920, 0
      %v1222 = vsel %vm209, %v921, 0
      %v1225 = vsel %vm209, %v922, 0
      %1227 = vmatprep.subr.mxu0 0.0
      %1228 = vmatpush1.xpose.msra.mxu0 %v1132
      %1229 = vmatprep.subr.mxu0 0.0
      %1230 = vmatpush1.xpose.msra.mxu0 %v1135
      %1231 = vmatprep.subr.mxu0 0.0
      %1232 = vmatpush1.xpose.msra.mxu0 %v1138
      %1233 = vmatprep.subr.mxu0 0.0
      %1234 = vmatpush1.xpose.msra.mxu0 %v1141
      %1235 = vmatprep.subr.mxu0 0.0
      %1236 = vmatpush1.xpose.msra.mxu0 %v1144
      %1237 = vmatprep.subr.mxu0 0.0
      %1238 = vmatpush1.xpose.msra.mxu0 %v1147
      %1239 = vmatprep.subr.mxu0 0.0
      %1240 = vmatpush1.xpose.msra.mxu0 %v1150
      %1241 = vmatprep.subr.mxu0 0.0
      %1242 = vmatpush1.xpose.msra.mxu0 %v1153
      %1243 = vmatprep.subr.mxu0 0.0
      %1244 = vmatpush1.xpose.msra.mxu0 %v1156
      %1245 = vmatprep.subr.mxu0 0.0
      %1246 = vmatpush1.xpose.msra.mxu0 %v1159
      %1247 = vmatprep.subr.mxu0 0.0
      %1248 = vmatpush1.xpose.msra.mxu0 %v1162
      %1249 = vmatprep.subr.mxu0 0.0
      %1250 = vmatpush1.xpose.msra.mxu0 %v1165
      %1251 = vmatprep.subr.mxu0 0.0
      %1252 = vmatpush1.xpose.msra.mxu0 %v1168
      %1253 = vmatprep.subr.mxu0 0.0
      %1254 = vmatpush1.xpose.msra.mxu0 %v1171
      %1255 = vmatprep.subr.mxu0 0.0
      %1256 = vmatpush1.xpose.msra.mxu0 %v1174
      %1257 = vmatprep.subr.mxu0 0.0
      %1258 = vmatpush1.xpose.msra.mxu0 %v1177
      %1259 = vmatprep.subr.mxu0 0.0
      %1260 = vmatpush1.xpose.msra.mxu0 %v1180
      %1261 = vmatprep.subr.mxu0 0.0
      %1262 = vmatpush1.xpose.msra.mxu0 %v1183
      %1263 = vmatprep.subr.mxu0 0.0
      %1264 = vmatpush1.xpose.msra.mxu0 %v1186
      %1265 = vmatprep.subr.mxu0 0.0
      %1266 = vmatpush1.xpose.msra.mxu0 %v1189
      %1267 = vmatprep.subr.mxu0 0.0
      %1268 = vmatpush1.xpose.msra.mxu0 %v1192
      %1269 = vmatprep.subr.mxu0 0.0
      %1270 = vmatpush1.xpose.msra.mxu0 %v1195
      %1271 = vmatprep.subr.mxu0 0.0
      %1272 = vmatpush1.xpose.msra.mxu0 %v1198
      %1273 = vmatprep.subr.mxu0 0.0
      %1274 = vmatpush1.xpose.msra.mxu0 %v1201
      %1275 = vmatprep.subr.mxu0 0.0
      %1276 = vmatpush1.xpose.msra.mxu0 %v1204
      %1277 = vmatprep.subr.mxu0 0.0
      %1278 = vmatpush1.xpose.msra.mxu0 %v1207
      %1279 = vmatprep.subr.mxu0 0.0
      %1280 = vmatpush1.xpose.msra.mxu0 %v1210
      %1281 = vmatprep.subr.mxu0 0.0
      %1282 = vmatpush1.xpose.msra.mxu0 %v1213
      %1283 = vmatprep.subr.mxu0 0.0
      %1284 = vmatpush1.xpose.msra.mxu0 %v1216
      %1285 = vmatprep.subr.mxu0 0.0
      %1286 = vmatpush1.xpose.msra.mxu0 %v1219
      %1287 = vmatprep.subr.mxu0 0.0
      %1288 = vmatpush1.xpose.msra.mxu0 %v1222
      %1289 = vmatprep.subr.mxu0 0.0
      %1290 = vmatpush1.xpose.msra.mxu0 %v1225
      %1291 = vmatprep.mubr.f32.mxu0 0.0
      %1292 = vmatmul.mubr.f32.gmra.mrb[0].mxu0 %v1129
      %v1293 = vpop.f32.mrb[0].mxu0
      %v1294 = vadd.f32 %v1124, %v1293
      %v1295 = vpop.f32.mrb[0].mxu0
      %v1296 = vadd.f32 %v1126, %v1295
      %1297 = vdwg.mxu0
      %v1298 = vld [vmem:[#allocation2 + $0x11] sm:$0xff]
      %v1299 = vld [vmem:[#allocation2 + $0x19] sm:$0xff]
      %v1300 = vld [vmem:[#allocation2 + $0x21] sm:$0xff]
      %v1301 = vld [vmem:[#allocation2 + $0x29] sm:$0xff]
      %v1302 = vld [vmem:[#allocation2 + $0x31] sm:$0xff]
      %v1303 = vld [vmem:[#allocation2 + $0x39] sm:$0xff]
      %v1304 = vld [vmem:[#allocation2 + $0x41] sm:$0xff]
      %v1305 = vld [vmem:[#allocation2 + $0x49] sm:$0xff]
      %v1306 = vld [vmem:[#allocation2 + $0x51] sm:$0xff]
      %v1307 = vld [vmem:[#allocation2 + $0x59] sm:$0xff]
      %v1308 = vld [vmem:[#allocation2 + $0x61] sm:$0xff]
      %v1309 = vld [vmem:[#allocation2 + $0x69] sm:$0xff]
      %v1310 = vld [vmem:[#allocation2 + $0x71] sm:$0xff]
      %v1311 = vld [vmem:[#allocation2 + $0x79] sm:$0xff]
      %v1312 = vld [vmem:[#allocation2 + $0x81] sm:$0xff]
      %v1313 = vld [vmem:[#allocation2 + $0x89] sm:$0xff]
      %v1314 = vld [vmem:[#allocation2 + $0x91] sm:$0xff]
      %v1315 = vld [vmem:[#allocation2 + $0x99] sm:$0xff]
      %v1316 = vld [vmem:[#allocation2 + $0xa1] sm:$0xff]
      %v1317 = vld [vmem:[#allocation2 + $0xa9] sm:$0xff]
      %v1318 = vld [vmem:[#allocation2 + $0xb1] sm:$0xff]
      %v1319 = vld [vmem:[#allocation2 + $0xb9] sm:$0xff]
      %v1320 = vld [vmem:[#allocation2 + $0xc1] sm:$0xff]
      %v1321 = vld [vmem:[#allocation2 + $0xc9] sm:$0xff]
      %v1322 = vld [vmem:[#allocation2 + $0xd1] sm:$0xff]
      %v1323 = vld [vmem:[#allocation2 + $0xd9] sm:$0xff]
      %v1324 = vld [vmem:[#allocation2 + $0xe1] sm:$0xff]
      %v1325 = vld [vmem:[#allocation2 + $0xe9] sm:$0xff]
      %v1326 = vld [vmem:[#allocation2 + $0xf1] sm:$0xff]
      %v1327 = vld [vmem:[#allocation2 + $0xf9] sm:$0xff]
      %v1328 = vld [vmem:[#allocation2 + $0x101] sm:$0xff]
      %v1329 = vld [vmem:[#allocation2 + $0x109] sm:$0xff]
      %v1330 = vsel %vm763, 1, 0
      %v1331 = vsel %vm764, 1, 0
      %v1332 = vsel %vm765, 1, 0
      %v1333 = vsel %vm766, 1, 0
      %v1334 = vsel %vm767, 1, 0
      %v1335 = vsel %vm768, 1, 0
      %v1336 = vsel %vm769, 1, 0
      %v1337 = vsel %vm770, 1, 0
      %v1338 = vsel %vm771, 1, 0
      %v1339 = vsel %vm772, 1, 0
      %v1340 = vsel %vm773, 1, 0
      %v1341 = vsel %vm774, 1, 0
      %v1342 = vsel %vm775, 1, 0
      %v1343 = vsel %vm776, 1, 0
      %v1344 = vsel %vm777, 1, 0
      %v1345 = vsel %vm778, 1, 0
      %v1346 = vsel %vm779, 1, 0
      %v1347 = vsel %vm780, 1, 0
      %v1348 = vsel %vm781, 1, 0
      %v1349 = vsel %vm782, 1, 0
      %v1350 = vsel %vm783, 1, 0
      %v1351 = vsel %vm784, 1, 0
      %v1352 = vsel %vm785, 1, 0
      %v1353 = vsel %vm786, 1, 0
      %v1354 = vsel %vm787, 1, 0
      %v1355 = vsel %vm788, 1, 0
      %v1356 = vsel %vm789, 1, 0
      %v1357 = vsel %vm790, 1, 0
      %v1358 = vsel %vm791, 1, 0
      %v1359 = vsel %vm792, 1, 0
      %v1360 = vsel %vm793, 1, 0
      %v1361 = vsel %vm794, 1, 0
      %vm1362 = vcmp.eq.s32.totalorder %v1330, 1
      %vm1363 = vcmp.eq.s32.totalorder %v1331, 1
      %vm1364 = vcmp.eq.s32.totalorder %v1332, 1
      %vm1365 = vcmp.eq.s32.totalorder %v1333, 1
      %vm1366 = vcmp.eq.s32.totalorder %v1334, 1
      %vm1367 = vcmp.eq.s32.totalorder %v1335, 1
      %vm1368 = vcmp.eq.s32.totalorder %v1336, 1
      %vm1369 = vcmp.eq.s32.totalorder %v1337, 1
      %vm1370 = vcmp.eq.s32.totalorder %v1338, 1
      %vm1371 = vcmp.eq.s32.totalorder %v1339, 1
      %vm1372 = vcmp.eq.s32.totalorder %v1340, 1
      %vm1373 = vcmp.eq.s32.totalorder %v1341, 1
      %vm1374 = vcmp.eq.s32.totalorder %v1342, 1
      %vm1375 = vcmp.eq.s32.totalorder %v1343, 1
      %vm1376 = vcmp.eq.s32.totalorder %v1344, 1
      %vm1377 = vcmp.eq.s32.totalorder %v1345, 1
      %vm1378 = vcmp.eq.s32.totalorder %v1346, 1
      %vm1379 = vcmp.eq.s32.totalorder %v1347, 1
      %vm1380 = vcmp.eq.s32.totalorder %v1348, 1
      %vm1381 = vcmp.eq.s32.totalorder %v1349, 1
      %vm1382 = vcmp.eq.s32.totalorder %v1350, 1
      %vm1383 = vcmp.eq.s32.totalorder %v1351, 1
      %vm1384 = vcmp.eq.s32.totalorder %v1352, 1
      %vm1385 = vcmp.eq.s32.totalorder %v1353, 1
      %vm1386 = vcmp.eq.s32.totalorder %v1354, 1
      %vm1387 = vcmp.eq.s32.totalorder %v1355, 1
      %vm1388 = vcmp.eq.s32.totalorder %v1356, 1
      %vm1389 = vcmp.eq.s32.totalorder %v1357, 1
      %vm1390 = vcmp.eq.s32.totalorder %v1358, 1
      %vm1391 = vcmp.eq.s32.totalorder %v1359, 1
      %vm1392 = vcmp.eq.s32.totalorder %v1360, 1
      %vm1393 = vcmp.eq.s32.totalorder %v1361, 1
      %v1394 = vsel %vm1362, %v1298, 0.0
      %v1395 = vsel %vm1363, %v1299, 0.0
      %v1396 = vsel %vm1364, %v1300, 0.0
      %v1397 = vsel %vm1365, %v1301, 0.0
      %v1398 = vsel %vm1366, %v1302, 0.0
      %v1399 = vsel %vm1367, %v1303, 0.0
      %v1400 = vsel %vm1368, %v1304, 0.0
      %v1401 = vsel %vm1369, %v1305, 0.0
      %v1402 = vsel %vm1370, %v1306, 0.0
      %v1403 = vsel %vm1371, %v1307, 0.0
      %v1404 = vsel %vm1372, %v1308, 0.0
      %v1405 = vsel %vm1373, %v1309, 0.0
      %v1406 = vsel %vm1374, %v1310, 0.0
      %v1407 = vsel %vm1375, %v1311, 0.0
      %v1408 = vsel %vm1376, %v1312, 0.0
      %v1409 = vsel %vm1377, %v1313, 0.0
      %v1410 = vsel %vm1378, %v1314, 0.0
      %v1411 = vsel %vm1379, %v1315, 0.0
      %v1412 = vsel %vm1380, %v1316, 0.0
      %v1413 = vsel %vm1381, %v1317, 0.0
      %v1414 = vsel %vm1382, %v1318, 0.0
      %v1415 = vsel %vm1383, %v1319, 0.0
      %v1416 = vsel %vm1384, %v1320, 0.0
      %v1417 = vsel %vm1385, %v1321, 0.0
      %v1418 = vsel %vm1386, %v1322, 0.0
      %v1419 = vsel %vm1387, %v1323, 0.0
      %v1420 = vsel %vm1388, %v1324, 0.0
      %v1421 = vsel %vm1389, %v1325, 0.0
      %v1422 = vsel %vm1390, %v1326, 0.0
      %v1423 = vsel %vm1391, %v1327, 0.0
      %v1424 = vsel %vm1392, %v1328, 0.0
      %v1425 = vsel %vm1393, %v1329, 0.0
      %s1426 = scalar_lea.vmem %s1, 16
      %v1427 = vld [vmem:[%s1426] sm:$0xff]
      %v1429 = vsel %vm209, %v1427, 0
      %v1432 = vsel %vm209, %v1394, 0
      %v1435 = vsel %vm209, %v1395, 0
      %v1438 = vsel %vm209, %v1396, 0
      %v1441 = vsel %vm209, %v1397, 0
      %v1444 = vsel %vm209, %v1398, 0
      %v1447 = vsel %vm209, %v1399, 0
      %v1450 = vsel %vm209, %v1400, 0
      %v1453 = vsel %vm209, %v1401, 0
      %v1456 = vsel %vm209, %v1402, 0
      %v1459 = vsel %vm209, %v1403, 0
      %v1462 = vsel %vm209, %v1404, 0
      %v1465 = vsel %vm209, %v1405, 0
      %v1468 = vsel %vm209, %v1406, 0
      %v1471 = vsel %vm209, %v1407, 0
      %v1474 = vsel %vm209, %v1408, 0
      %v1477 = vsel %vm209, %v1409, 0
      %v1480 = vsel %vm209, %v1410, 0
      %v1483 = vsel %vm209, %v1411, 0
      %v1486 = vsel %vm209, %v1412, 0
      %v1489 = vsel %vm209, %v1413, 0
      %v1492 = vsel %vm209, %v1414, 0
      %v1495 = vsel %vm209, %v1415, 0
      %v1498 = vsel %vm209, %v1416, 0
      %v1501 = vsel %vm209, %v1417, 0
      %v1504 = vsel %vm209, %v1418, 0
      %v1507 = vsel %vm209, %v1419, 0
      %v1510 = vsel %vm209, %v1420, 0
      %v1513 = vsel %vm209, %v1421, 0
      %v1516 = vsel %vm209, %v1422, 0
      %v1519 = vsel %vm209, %v1423, 0
      %v1522 = vsel %vm209, %v1424, 0
      %v1525 = vsel %vm209, %v1425, 0
      %1527 = vmatprep.subr.mxu0 0.0
      %1528 = vmatpush1.xpose.msra.mxu0 %v1432
      %1529 = vmatprep.subr.mxu0 0.0
      %1530 = vmatpush1.xpose.msra.mxu0 %v1435
      %1531 = vmatprep.subr.mxu0 0.0
      %1532 = vmatpush1.xpose.msra.mxu0 %v1438
      %1533 = vmatprep.subr.mxu0 0.0
      %1534 = vmatpush1.xpose.msra.mxu0 %v1441
      %1535 = vmatprep.subr.mxu0 0.0
      %1536 = vmatpush1.xpose.msra.mxu0 %v1444
      %1537 = vmatprep.subr.mxu0 0.0
      %1538 = vmatpush1.xpose.msra.mxu0 %v1447
      %1539 = vmatprep.subr.mxu0 0.0
      %1540 = vmatpush1.xpose.msra.mxu0 %v1450
      %1541 = vmatprep.subr.mxu0 0.0
      %1542 = vmatpush1.xpose.msra.mxu0 %v1453
      %1543 = vmatprep.subr.mxu0 0.0
      %1544 = vmatpush1.xpose.msra.mxu0 %v1456
      %1545 = vmatprep.subr.mxu0 0.0
      %1546 = vmatpush1.xpose.msra.mxu0 %v1459
      %1547 = vmatprep.subr.mxu0 0.0
      %1548 = vmatpush1.xpose.msra.mxu0 %v1462
      %1549 = vmatprep.subr.mxu0 0.0
      %1550 = vmatpush1.xpose.msra.mxu0 %v1465
      %1551 = vmatprep.subr.mxu0 0.0
      %1552 = vmatpush1.xpose.msra.mxu0 %v1468
      %1553 = vmatprep.subr.mxu0 0.0
      %1554 = vmatpush1.xpose.msra.mxu0 %v1471
      %1555 = vmatprep.subr.mxu0 0.0
      %1556 = vmatpush1.xpose.msra.mxu0 %v1474
      %1557 = vmatprep.subr.mxu0 0.0
      %1558 = vmatpush1.xpose.msra.mxu0 %v1477
      %1559 = vmatprep.subr.mxu0 0.0
      %1560 = vmatpush1.xpose.msra.mxu0 %v1480
      %1561 = vmatprep.subr.mxu0 0.0
      %1562 = vmatpush1.xpose.msra.mxu0 %v1483
      %1563 = vmatprep.subr.mxu0 0.0
      %1564 = vmatpush1.xpose.msra.mxu0 %v1486
      %1565 = vmatprep.subr.mxu0 0.0
      %1566 = vmatpush1.xpose.msra.mxu0 %v1489
      %1567 = vmatprep.subr.mxu0 0.0
      %1568 = vmatpush1.xpose.msra.mxu0 %v1492
      %1569 = vmatprep.subr.mxu0 0.0
      %1570 = vmatpush1.xpose.msra.mxu0 %v1495
      %1571 = vmatprep.subr.mxu0 0.0
      %1572 = vmatpush1.xpose.msra.mxu0 %v1498
      %1573 = vmatprep.subr.mxu0 0.0
      %1574 = vmatpush1.xpose.msra.mxu0 %v1501
      %1575 = vmatprep.subr.mxu0 0.0
      %1576 = vmatpush1.xpose.msra.mxu0 %v1504
      %1577 = vmatprep.subr.mxu0 0.0
      %1578 = vmatpush1.xpose.msra.mxu0 %v1507
      %1579 = vmatprep.subr.mxu0 0.0
      %1580 = vmatpush1.xpose.msra.mxu0 %v1510
      %1581 = vmatprep.subr.mxu0 0.0
      %1582 = vmatpush1.xpose.msra.mxu0 %v1513
      %1583 = vmatprep.subr.mxu0 0.0
      %1584 = vmatpush1.xpose.msra.mxu0 %v1516
      %1585 = vmatprep.subr.mxu0 0.0
      %1586 = vmatpush1.xpose.msra.mxu0 %v1519
      %1587 = vmatprep.subr.mxu0 0.0
      %1588 = vmatpush1.xpose.msra.mxu0 %v1522
      %1589 = vmatprep.subr.mxu0 0.0
      %1590 = vmatpush1.xpose.msra.mxu0 %v1525
      %1591 = vmatprep.mubr.f32.mxu0 0.0
      %1592 = vmatmul.mubr.f32.gmra.mrb[0].mxu0 %v1429
      %v1593 = vpop.f32.mrb[0].mxu0
      %v1594 = vadd.f32 0.0, %v1593
      %v1595 = vpop.f32.mrb[0].mxu0
      %v1596 = vadd.f32 0.0, %v1595
      %1597 = vdwg.mxu0
      %v1598 = vadd.f32 %v1294, %v1594
      %v1599 = vadd.f32 %v1296, %v1596
      %v1600 = vld [vmem:[#allocation2 + $0x1f] sm:$0xff]
      %v1601 = vld [vmem:[#allocation2 + $0x27] sm:$0xff]
      %v1602 = vld [vmem:[#allocation2 + $0x2f] sm:$0xff]
      %v1603 = vld [vmem:[#allocation2 + $0x37] sm:$0xff]
      %v1604 = vld [vmem:[#allocation2 + $0x3f] sm:$0xff]
      %v1605 = vld [vmem:[#allocation2 + $0x47] sm:$0xff]
      %v1606 = vld [vmem:[#allocation2 + $0x4f] sm:$0xff]
      %v1607 = vld [vmem:[#allocation2 + $0x57] sm:$0xff]
      %v1608 = vld [vmem:[#allocation2 + $0x5f] sm:$0xff]
      %v1609 = vld [vmem:[#allocation2 + $0x67] sm:$0xff]
      %v1610 = vld [vmem:[#allocation2 + $0x6f] sm:$0xff]
      %v1611 = vld [vmem:[#allocation2 + $0x77] sm:$0xff]
      %v1612 = vld [vmem:[#allocation2 + $0x7f] sm:$0xff]
      %v1613 = vld [vmem:[#allocation2 + $0x87] sm:$0xff]
      %v1614 = vld [vmem:[#allocation2 + $0x8f] sm:$0xff]
      %v1615 = vld [vmem:[#allocation2 + $0x97] sm:$0xff]
      %v1616 = vld [vmem:[#allocation2 + $0x9f] sm:$0xff]
      %v1617 = vld [vmem:[#allocation2 + $0xa7] sm:$0xff]
      %v1618 = vld [vmem:[#allocation2 + $0xaf] sm:$0xff]
      %v1619 = vld [vmem:[#allocation2 + $0xb7] sm:$0xff]
      %v1620 = vld [vmem:[#allocation2 + $0xbf] sm:$0xff]
      %v1621 = vld [vmem:[#allocation2 + $0xc7] sm:$0xff]
      %v1622 = vld [vmem:[#allocation2 + $0xcf] sm:$0xff]
      %v1623 = vld [vmem:[#allocation2 + $0xd7] sm:$0xff]
      %v1624 = vld [vmem:[#allocation2 + $0xdf] sm:$0xff]
      %v1625 = vld [vmem:[#allocation2 + $0xe7] sm:$0xff]
      %v1626 = vld [vmem:[#allocation2 + $0xef] sm:$0xff]
      %v1627 = vld [vmem:[#allocation2 + $0xf7] sm:$0xff]
      %v1628 = vld [vmem:[#allocation2 + $0xff] sm:$0xff]
      %v1629 = vld [vmem:[#allocation2 + $0x107] sm:$0xff]
      %v1630 = vld [vmem:[#allocation2 + $0x10f] sm:$0xff]
      %v1631 = vld [vmem:[#allocation2 + $0x117] sm:$0xff]
      %v1632 = vsel %vm859, %v1600, 0.0
      %v1633 = vsel %vm860, %v1601, 0.0
      %v1634 = vsel %vm861, %v1602, 0.0
      %v1635 = vsel %vm862, %v1603, 0.0
      %v1636 = vsel %vm863, %v1604, 0.0
      %v1637 = vsel %vm864, %v1605, 0.0
      %v1638 = vsel %vm865, %v1606, 0.0
      %v1639 = vsel %vm866, %v1607, 0.0
      %v1640 = vsel %vm867, %v1608, 0.0
      %v1641 = vsel %vm868, %v1609, 0.0
      %v1642 = vsel %vm869, %v1610, 0.0
      %v1643 = vsel %vm870, %v1611, 0.0
      %v1644 = vsel %vm871, %v1612, 0.0
      %v1645 = vsel %vm872, %v1613, 0.0
      %v1646 = vsel %vm873, %v1614, 0.0
      %v1647 = vsel %vm874, %v1615, 0.0
      %v1648 = vsel %vm875, %v1616, 0.0
      %v1649 = vsel %vm876, %v1617, 0.0
      %v1650 = vsel %vm877, %v1618, 0.0
      %v1651 = vsel %vm878, %v1619, 0.0
      %v1652 = vsel %vm879, %v1620, 0.0
      %v1653 = vsel %vm880, %v1621, 0.0
      %v1654 = vsel %vm881, %v1622, 0.0
      %v1655 = vsel %vm882, %v1623, 0.0
      %v1656 = vsel %vm883, %v1624, 0.0
      %v1657 = vsel %vm884, %v1625, 0.0
      %v1658 = vsel %vm885, %v1626, 0.0
      %v1659 = vsel %vm886, %v1627, 0.0
      %v1660 = vsel %vm887, %v1628, 0.0
      %v1661 = vsel %vm888, %v1629, 0.0
      %v1662 = vsel %vm889, %v1630, 0.0
      %v1663 = vsel %vm890, %v1631, 0.0
      %s1664 = scalar_lea.vmem %s1, 24
      %v1665 = vld [vmem:[%s1664] sm:$0xff]
      %v1667 = vsel %vm209, %v1665, 0
      %v1670 = vsel %vm209, %v1632, 0
      %v1673 = vsel %vm209, %v1633, 0
      %v1676 = vsel %vm209, %v1634, 0
      %v1679 = vsel %vm209, %v1635, 0
      %v1682 = vsel %vm209, %v1636, 0
      %v1685 = vsel %vm209, %v1637, 0
      %v1688 = vsel %vm209, %v1638, 0
      %v1691 = vsel %vm209, %v1639, 0
      %v1694 = vsel %vm209, %v1640, 0
      %v1697 = vsel %vm209, %v1641, 0
      %v1700 = vsel %vm209, %v1642, 0
      %v1703 = vsel %vm209, %v1643, 0
      %v1706 = vsel %vm209, %v1644, 0
      %v1709 = vsel %vm209, %v1645, 0
      %v1712 = vsel %vm209, %v1646, 0
      %v1715 = vsel %vm209, %v1647, 0
      %v1718 = vsel %vm209, %v1648, 0
      %v1721 = vsel %vm209, %v1649, 0
      %v1724 = vsel %vm209, %v1650, 0
      %v1727 = vsel %vm209, %v1651, 0
      %v1730 = vsel %vm209, %v1652, 0
      %v1733 = vsel %vm209, %v1653, 0
      %v1736 = vsel %vm209, %v1654, 0
      %v1739 = vsel %vm209, %v1655, 0
      %v1742 = vsel %vm209, %v1656, 0
      %v1745 = vsel %vm209, %v1657, 0
      %v1748 = vsel %vm209, %v1658, 0
      %v1751 = vsel %vm209, %v1659, 0
      %v1754 = vsel %vm209, %v1660, 0
      %v1757 = vsel %vm209, %v1661, 0
      %v1760 = vsel %vm209, %v1662, 0
      %v1763 = vsel %vm209, %v1663, 0
      %1765 = vmatprep.subr.mxu0 0.0
      %1766 = vmatpush1.xpose.msra.mxu0 %v1670
      %1767 = vmatprep.subr.mxu0 0.0
      %1768 = vmatpush1.xpose.msra.mxu0 %v1673
      %1769 = vmatprep.subr.mxu0 0.0
      %1770 = vmatpush1.xpose.msra.mxu0 %v1676
      %1771 = vmatprep.subr.mxu0 0.0
      %1772 = vmatpush1.xpose.msra.mxu0 %v1679
      %1773 = vmatprep.subr.mxu0 0.0
      %1774 = vmatpush1.xpose.msra.mxu0 %v1682
      %1775 = vmatprep.subr.mxu0 0.0
      %1776 = vmatpush1.xpose.msra.mxu0 %v1685
      %1777 = vmatprep.subr.mxu0 0.0
      %1778 = vmatpush1.xpose.msra.mxu0 %v1688
      %1779 = vmatprep.subr.mxu0 0.0
      %1780 = vmatpush1.xpose.msra.mxu0 %v1691
      %1781 = vmatprep.subr.mxu0 0.0
      %1782 = vmatpush1.xpose.msra.mxu0 %v1694
      %1783 = vmatprep.subr.mxu0 0.0
      %1784 = vmatpush1.xpose.msra.mxu0 %v1697
      %1785 = vmatprep.subr.mxu0 0.0
      %1786 = vmatpush1.xpose.msra.mxu0 %v1700
      %1787 = vmatprep.subr.mxu0 0.0
      %1788 = vmatpush1.xpose.msra.mxu0 %v1703
      %1789 = vmatprep.subr.mxu0 0.0
      %1790 = vmatpush1.xpose.msra.mxu0 %v1706
      %1791 = vmatprep.subr.mxu0 0.0
      %1792 = vmatpush1.xpose.msra.mxu0 %v1709
      %1793 = vmatprep.subr.mxu0 0.0
      %1794 = vmatpush1.xpose.msra.mxu0 %v1712
      %1795 = vmatprep.subr.mxu0 0.0
      %1796 = vmatpush1.xpose.msra.mxu0 %v1715
      %1797 = vmatprep.subr.mxu0 0.0
      %1798 = vmatpush1.xpose.msra.mxu0 %v1718
      %1799 = vmatprep.subr.mxu0 0.0
      %1800 = vmatpush1.xpose.msra.mxu0 %v1721
      %1801 = vmatprep.subr.mxu0 0.0
      %1802 = vmatpush1.xpose.msra.mxu0 %v1724
      %1803 = vmatprep.subr.mxu0 0.0
      %1804 = vmatpush1.xpose.msra.mxu0 %v1727
      %1805 = vmatprep.subr.mxu0 0.0
      %1806 = vmatpush1.xpose.msra.mxu0 %v1730
      %1807 = vmatprep.subr.mxu0 0.0
      %1808 = vmatpush1.xpose.msra.mxu0 %v1733
      %1809 = vmatprep.subr.mxu0 0.0
      %1810 = vmatpush1.xpose.msra.mxu0 %v1736
      %1811 = vmatprep.subr.mxu0 0.0
      %1812 = vmatpush1.xpose.msra.mxu0 %v1739
      %1813 = vmatprep.subr.mxu0 0.0
      %1814 = vmatpush1.xpose.msra.mxu0 %v1742
      %1815 = vmatprep.subr.mxu0 0.0
      %1816 = vmatpush1.xpose.msra.mxu0 %v1745
      %1817 = vmatprep.subr.mxu0 0.0
      %1818 = vmatpush1.xpose.msra.mxu0 %v1748
      %1819 = vmatprep.subr.mxu0 0.0
      %1820 = vmatpush1.xpose.msra.mxu0 %v1751
      %1821 = vmatprep.subr.mxu0 0.0
      %1822 = vmatpush1.xpose.msra.mxu0 %v1754
      %1823 = vmatprep.subr.mxu0 0.0
      %1824 = vmatpush1.xpose.msra.mxu0 %v1757
      %1825 = vmatprep.subr.mxu0 0.0
      %1826 = vmatpush1.xpose.msra.mxu0 %v1760
      %1827 = vmatprep.subr.mxu0 0.0
      %1828 = vmatpush1.xpose.msra.mxu0 %v1763
      %1829 = vmatprep.mubr.f32.mxu0 0.0
      %1830 = vmatmul.mubr.f32.gmra.mrb[0].mxu0 %v1667
      %v1831 = vpop.f32.mrb[0].mxu0
      %v1832 = vadd.f32 0.0, %v1831
      %v1833 = vpop.f32.mrb[0].mxu0
      %v1834 = vadd.f32 0.0, %v1833
      %1835 = vdwg.mxu0
      %v1836 = vadd.f32 %v1598, %v1832
      %v1837 = vadd.f32 %v1599, %v1834
      %v1838 = vld [vmem:[#allocation2 + $0x20] sm:$0xff]
      %v1839 = vld [vmem:[#allocation2 + $0x28] sm:$0xff]
      %v1840 = vld [vmem:[#allocation2 + $0x30] sm:$0xff]
      %v1841 = vld [vmem:[#allocation2 + $0x38] sm:$0xff]
      %v1842 = vld [vmem:[#allocation2 + $0x40] sm:$0xff]
      %v1843 = vld [vmem:[#allocation2 + $0x48] sm:$0xff]
      %v1844 = vld [vmem:[#allocation2 + $0x50] sm:$0xff]
      %v1845 = vld [vmem:[#allocation2 + $0x58] sm:$0xff]
      %v1846 = vld [vmem:[#allocation2 + $0x60] sm:$0xff]
      %v1847 = vld [vmem:[#allocation2 + $0x68] sm:$0xff]
      %v1848 = vld [vmem:[#allocation2 + $0x70] sm:$0xff]
      %v1849 = vld [vmem:[#allocation2 + $0x78] sm:$0xff]
      %v1850 = vld [vmem:[#allocation2 + $0x80] sm:$0xff]
      %v1851 = vld [vmem:[#allocation2 + $0x88] sm:$0xff]
      %v1852 = vld [vmem:[#allocation2 + $0x90] sm:$0xff]
      %v1853 = vld [vmem:[#allocation2 + $0x98] sm:$0xff]
      %v1854 = vld [vmem:[#allocation2 + $0xa0] sm:$0xff]
      %v1855 = vld [vmem:[#allocation2 + $0xa8] sm:$0xff]
      %v1856 = vld [vmem:[#allocation2 + $0xb0] sm:$0xff]
      %v1857 = vld [vmem:[#allocation2 + $0xb8] sm:$0xff]
      %v1858 = vld [vmem:[#allocation2 + $0xc0] sm:$0xff]
      %v1859 = vld [vmem:[#allocation2 + $0xc8] sm:$0xff]
      %v1860 = vld [vmem:[#allocation2 + $0xd0] sm:$0xff]
      %v1861 = vld [vmem:[#allocation2 + $0xd8] sm:$0xff]
      %v1862 = vld [vmem:[#allocation2 + $0xe0] sm:$0xff]
      %v1863 = vld [vmem:[#allocation2 + $0xe8] sm:$0xff]
      %v1864 = vld [vmem:[#allocation2 + $0xf0] sm:$0xff]
      %v1865 = vld [vmem:[#allocation2 + $0xf8] sm:$0xff]
      %v1866 = vld [vmem:[#allocation2 + $0x100] sm:$0xff]
      %v1867 = vld [vmem:[#allocation2 + $0x108] sm:$0xff]
      %v1868 = vld [vmem:[#allocation2 + $0x110] sm:$0xff]
      %v1869 = vld [vmem:[#allocation2 + $0x118] sm:$0xff]
      %s1870 = scalar_lea.vmem %s1, 32
      %v1871 = vld [vmem:[%s1870] sm:$0xff]
      %v1873 = vsel %vm209, %v1871, 0
      %v1876 = vsel %vm209, %v1838, 0
      %v1879 = vsel %vm209, %v1839, 0
      %v1882 = vsel %vm209, %v1840, 0
      %v1885 = vsel %vm209, %v1841, 0
      %v1888 = vsel %vm209, %v1842, 0
      %v1891 = vsel %vm209, %v1843, 0
      %v1894 = vsel %vm209, %v1844, 0
      %v1897 = vsel %vm209, %v1845, 0
      %v1900 = vsel %vm209, %v1846, 0
      %v1903 = vsel %vm209, %v1847, 0
      %v1906 = vsel %vm209, %v1848, 0
      %v1909 = vsel %vm209, %v1849, 0
      %v1912 = vsel %vm209, %v1850, 0
      %v1915 = vsel %vm209, %v1851, 0
      %v1918 = vsel %vm209, %v1852, 0
      %v1921 = vsel %vm209, %v1853, 0
      %v1924 = vsel %vm209, %v1854, 0
      %v1927 = vsel %vm209, %v1855, 0
      %v1930 = vsel %vm209, %v1856, 0
      %v1933 = vsel %vm209, %v1857, 0
      %v1936 = vsel %vm209, %v1858, 0
      %v1939 = vsel %vm209, %v1859, 0
      %v1942 = vsel %vm209, %v1860, 0
      %v1945 = vsel %vm209, %v1861, 0
      %v1948 = vsel %vm209, %v1862, 0
      %v1951 = vsel %vm209, %v1863, 0
      %v1954 = vsel %vm209, %v1864, 0
      %v1957 = vsel %vm209, %v1865, 0
      %v1960 = vsel %vm209, %v1866, 0
      %v1963 = vsel %vm209, %v1867, 0
      %v1966 = vsel %vm209, %v1868, 0
      %v1969 = vsel %vm209, %v1869, 0
      %1971 = vmatprep.subr.mxu0 0.0
      %1972 = vmatpush1.xpose.msra.mxu0 %v1876
      %1973 = vmatprep.subr.mxu0 0.0
      %1974 = vmatpush1.xpose.msra.mxu0 %v1879
      %1975 = vmatprep.subr.mxu0 0.0
      %1976 = vmatpush1.xpose.msra.mxu0 %v1882
      %1977 = vmatprep.subr.mxu0 0.0
      %1978 = vmatpush1.xpose.msra.mxu0 %v1885
      %1979 = vmatprep.subr.mxu0 0.0
      %1980 = vmatpush1.xpose.msra.mxu0 %v1888
      %1981 = vmatprep.subr.mxu0 0.0
      %1982 = vmatpush1.xpose.msra.mxu0 %v1891
      %1983 = vmatprep.subr.mxu0 0.0
      %1984 = vmatpush1.xpose.msra.mxu0 %v1894
      %1985 = vmatprep.subr.mxu0 0.0
      %1986 = vmatpush1.xpose.msra.mxu0 %v1897
      %1987 = vmatprep.subr.mxu0 0.0
      %1988 = vmatpush1.xpose.msra.mxu0 %v1900
      %1989 = vmatprep.subr.mxu0 0.0
      %1990 = vmatpush1.xpose.msra.mxu0 %v1903
      %1991 = vmatprep.subr.mxu0 0.0
      %1992 = vmatpush1.xpose.msra.mxu0 %v1906
      %1993 = vmatprep.subr.mxu0 0.0
      %1994 = vmatpush1.xpose.msra.mxu0 %v1909
      %1995 = vmatprep.subr.mxu0 0.0
      %1996 = vmatpush1.xpose.msra.mxu0 %v1912
      %1997 = vmatprep.subr.mxu0 0.0
      %1998 = vmatpush1.xpose.msra.mxu0 %v1915
      %1999 = vmatprep.subr.mxu0 0.0
      %2000 = vmatpush1.xpose.msra.mxu0 %v1918
      %2001 = vmatprep.subr.mxu0 0.0
      %2002 = vmatpush1.xpose.msra.mxu0 %v1921
      %2003 = vmatprep.subr.mxu0 0.0
      %2004 = vmatpush1.xpose.msra.mxu0 %v1924
      %2005 = vmatprep.subr.mxu0 0.0
      %2006 = vmatpush1.xpose.msra.mxu0 %v1927
      %2007 = vmatprep.subr.mxu0 0.0
      %2008 = vmatpush1.xpose.msra.mxu0 %v1930
      %2009 = vmatprep.subr.mxu0 0.0
      %2010 = vmatpush1.xpose.msra.mxu0 %v1933
      %2011 = vmatprep.subr.mxu0 0.0
      %2012 = vmatpush1.xpose.msra.mxu0 %v1936
      %2013 = vmatprep.subr.mxu0 0.0
      %2014 = vmatpush1.xpose.msra.mxu0 %v1939
      %2015 = vmatprep.subr.mxu0 0.0
      %2016 = vmatpush1.xpose.msra.mxu0 %v1942
      %2017 = vmatprep.subr.mxu0 0.0
      %2018 = vmatpush1.xpose.msra.mxu0 %v1945
      %2019 = vmatprep.subr.mxu0 0.0
      %2020 = vmatpush1.xpose.msra.mxu0 %v1948
      %2021 = vmatprep.subr.mxu0 0.0
      %2022 = vmatpush1.xpose.msra.mxu0 %v1951
      %2023 = vmatprep.subr.mxu0 0.0
      %2024 = vmatpush1.xpose.msra.mxu0 %v1954
      %2025 = vmatprep.subr.mxu0 0.0
      %2026 = vmatpush1.xpose.msra.mxu0 %v1957
      %2027 = vmatprep.subr.mxu0 0.0
      %2028 = vmatpush1.xpose.msra.mxu0 %v1960
      %2029 = vmatprep.subr.mxu0 0.0
      %2030 = vmatpush1.xpose.msra.mxu0 %v1963
      %2031 = vmatprep.subr.mxu0 0.0
      %2032 = vmatpush1.xpose.msra.mxu0 %v1966
      %2033 = vmatprep.subr.mxu0 0.0
      %2034 = vmatpush1.xpose.msra.mxu0 %v1969
      %2035 = vmatprep.mubr.f32.mxu0 0.0
      %2036 = vmatmul.mubr.f32.gmra.mrb[0].mxu0 %v1873
      %v2037 = vpop.f32.mrb[0].mxu0
      %v2038 = vadd.f32 0.0, %v2037
      %v2039 = vpop.f32.mrb[0].mxu0
      %v2040 = vadd.f32 0.0, %v2039
      %2041 = vdwg.mxu0
      %v2042 = vadd.f32 %v1836, %v2038
      %v2043 = vadd.f32 %v1837, %v2040
      %v2044 = vld [vmem:[#allocation2 + $0x21] sm:$0xff]
      %v2045 = vld [vmem:[#allocation2 + $0x29] sm:$0xff]
      %v2046 = vld [vmem:[#allocation2 + $0x31] sm:$0xff]
      %v2047 = vld [vmem:[#allocation2 + $0x39] sm:$0xff]
      %v2048 = vld [vmem:[#allocation2 + $0x41] sm:$0xff]
      %v2049 = vld [vmem:[#allocation2 + $0x49] sm:$0xff]
      %v2050 = vld [vmem:[#allocation2 + $0x51] sm:$0xff]
      %v2051 = vld [vmem:[#allocation2 + $0x59] sm:$0xff]
      %v2052 = vld [vmem:[#allocation2 + $0x61] sm:$0xff]
      %v2053 = vld [vmem:[#allocation2 + $0x69] sm:$0xff]
      %v2054 = vld [vmem:[#allocation2 + $0x71] sm:$0xff]
      %v2055 = vld [vmem:[#allocation2 + $0x79] sm:$0xff]
      %v2056 = vld [vmem:[#allocation2 + $0x81] sm:$0xff]
      %v2057 = vld [vmem:[#allocation2 + $0x89] sm:$0xff]
      %v2058 = vld [vmem:[#allocation2 + $0x91] sm:$0xff]
      %v2059 = vld [vmem:[#allocation2 + $0x99] sm:$0xff]
      %v2060 = vld [vmem:[#allocation2 + $0xa1] sm:$0xff]
      %v2061 = vld [vmem:[#allocation2 + $0xa9] sm:$0xff]
      %v2062 = vld [vmem:[#allocation2 + $0xb1] sm:$0xff]
      %v2063 = vld [vmem:[#allocation2 + $0xb9] sm:$0xff]
      %v2064 = vld [vmem:[#allocation2 + $0xc1] sm:$0xff]
      %v2065 = vld [vmem:[#allocation2 + $0xc9] sm:$0xff]
      %v2066 = vld [vmem:[#allocation2 + $0xd1] sm:$0xff]
      %v2067 = vld [vmem:[#allocation2 + $0xd9] sm:$0xff]
      %v2068 = vld [vmem:[#allocation2 + $0xe1] sm:$0xff]
      %v2069 = vld [vmem:[#allocation2 + $0xe9] sm:$0xff]
      %v2070 = vld [vmem:[#allocation2 + $0xf1] sm:$0xff]
      %v2071 = vld [vmem:[#allocation2 + $0xf9] sm:$0xff]
      %v2072 = vld [vmem:[#allocation2 + $0x101] sm:$0xff]
      %v2073 = vld [vmem:[#allocation2 + $0x109] sm:$0xff]
      %v2074 = vld [vmem:[#allocation2 + $0x111] sm:$0xff]
      %v2075 = vld [vmem:[#allocation2 + $0x119] sm:$0xff]
      %v2076 = vsel %vm1362, %v2044, 0.0
      %v2077 = vsel %vm1363, %v2045, 0.0
      %v2078 = vsel %vm1364, %v2046, 0.0
      %v2079 = vsel %vm1365, %v2047, 0.0
      %v2080 = vsel %vm1366, %v2048, 0.0
      %v2081 = vsel %vm1367, %v2049, 0.0
      %v2082 = vsel %vm1368, %v2050, 0.0
      %v2083 = vsel %vm1369, %v2051, 0.0
      %v2084 = vsel %vm1370, %v2052, 0.0
      %v2085 = vsel %vm1371, %v2053, 0.0
      %v2086 = vsel %vm1372, %v2054, 0.0
      %v2087 = vsel %vm1373, %v2055, 0.0
      %v2088 = vsel %vm1374, %v2056, 0.0
      %v2089 = vsel %vm1375, %v2057, 0.0
      %v2090 = vsel %vm1376, %v2058, 0.0
      %v2091 = vsel %vm1377, %v2059, 0.0
      %v2092 = vsel %vm1378, %v2060, 0.0
      %v2093 = vsel %vm1379, %v2061, 0.0
      %v2094 = vsel %vm1380, %v2062, 0.0
      %v2095 = vsel %vm1381, %v2063, 0.0
      %v2096 = vsel %vm1382, %v2064, 0.0
      %v2097 = vsel %vm1383, %v2065, 0.0
      %v2098 = vsel %vm1384, %v2066, 0.0
      %v2099 = vsel %vm1385, %v2067, 0.0
      %v2100 = vsel %vm1386, %v2068, 0.0
      %v2101 = vsel %vm1387, %v2069, 0.0
      %v2102 = vsel %vm1388, %v2070, 0.0
      %v2103 = vsel %vm1389, %v2071, 0.0
      %v2104 = vsel %vm1390, %v2072, 0.0
      %v2105 = vsel %vm1391, %v2073, 0.0
      %v2106 = vsel %vm1392, %v2074, 0.0
      %v2107 = vsel %vm1393, %v2075, 0.0
      %s2108 = scalar_lea.vmem %s1, 40
      %v2109 = vld [vmem:[%s2108] sm:$0xff]
      %v2111 = vsel %vm209, %v2109, 0
      %v2114 = vsel %vm209, %v2076, 0
      %v2117 = vsel %vm209, %v2077, 0
      %v2120 = vsel %vm209, %v2078, 0
      %v2123 = vsel %vm209, %v2079, 0
      %v2126 = vsel %vm209, %v2080, 0
      %v2129 = vsel %vm209, %v2081, 0
      %v2132 = vsel %vm209, %v2082, 0
      %v2135 = vsel %vm209, %v2083, 0
      %v2138 = vsel %vm209, %v2084, 0
      %v2141 = vsel %vm209, %v2085, 0
      %v2144 = vsel %vm209, %v2086, 0
      %v2147 = vsel %vm209, %v2087, 0
      %v2150 = vsel %vm209, %v2088, 0
      %v2153 = vsel %vm209, %v2089, 0
      %v2156 = vsel %vm209, %v2090, 0
      %v2159 = vsel %vm209, %v2091, 0
      %v2162 = vsel %vm209, %v2092, 0
      %v2165 = vsel %vm209, %v2093, 0
      %v2168 = vsel %vm209, %v2094, 0
      %v2171 = vsel %vm209, %v2095, 0
      %v2174 = vsel %vm209, %v2096, 0
      %v2177 = vsel %vm209, %v2097, 0
      %v2180 = vsel %vm209, %v2098, 0
      %v2183 = vsel %vm209, %v2099, 0
      %v2186 = vsel %vm209, %v2100, 0
      %v2189 = vsel %vm209, %v2101, 0
      %v2192 = vsel %vm209, %v2102, 0
      %v2195 = vsel %vm209, %v2103, 0
      %v2198 = vsel %vm209, %v2104, 0
      %v2201 = vsel %vm209, %v2105, 0
      %v2204 = vsel %vm209, %v2106, 0
      %v2207 = vsel %vm209, %v2107, 0
      %2209 = vmatprep.subr.mxu0 0.0
      %2210 = vmatpush1.xpose.msra.mxu0 %v2114
      %2211 = vmatprep.subr.mxu0 0.0
      %2212 = vmatpush1.xpose.msra.mxu0 %v2117
      %2213 = vmatprep.subr.mxu0 0.0
      %2214 = vmatpush1.xpose.msra.mxu0 %v2120
      %2215 = vmatprep.subr.mxu0 0.0
      %2216 = vmatpush1.xpose.msra.mxu0 %v2123
      %2217 = vmatprep.subr.mxu0 0.0
      %2218 = vmatpush1.xpose.msra.mxu0 %v2126
      %2219 = vmatprep.subr.mxu0 0.0
      %2220 = vmatpush1.xpose.msra.mxu0 %v2129
      %2221 = vmatprep.subr.mxu0 0.0
      %2222 = vmatpush1.xpose.msra.mxu0 %v2132
      %2223 = vmatprep.subr.mxu0 0.0
      %2224 = vmatpush1.xpose.msra.mxu0 %v2135
      %2225 = vmatprep.subr.mxu0 0.0
      %2226 = vmatpush1.xpose.msra.mxu0 %v2138
      %2227 = vmatprep.subr.mxu0 0.0
      %2228 = vmatpush1.xpose.msra.mxu0 %v2141
      %2229 = vmatprep.subr.mxu0 0.0
      %2230 = vmatpush1.xpose.msra.mxu0 %v2144
      %2231 = vmatprep.subr.mxu0 0.0
      %2232 = vmatpush1.xpose.msra.mxu0 %v2147
      %2233 = vmatprep.subr.mxu0 0.0
      %2234 = vmatpush1.xpose.msra.mxu0 %v2150
      %2235 = vmatprep.subr.mxu0 0.0
      %2236 = vmatpush1.xpose.msra.mxu0 %v2153
      %2237 = vmatprep.subr.mxu0 0.0
      %2238 = vmatpush1.xpose.msra.mxu0 %v2156
      %2239 = vmatprep.subr.mxu0 0.0
      %2240 = vmatpush1.xpose.msra.mxu0 %v2159
      %2241 = vmatprep.subr.mxu0 0.0
      %2242 = vmatpush1.xpose.msra.mxu0 %v2162
      %2243 = vmatprep.subr.mxu0 0.0
      %2244 = vmatpush1.xpose.msra.mxu0 %v2165
      %2245 = vmatprep.subr.mxu0 0.0
      %2246 = vmatpush1.xpose.msra.mxu0 %v2168
      %2247 = vmatprep.subr.mxu0 0.0
      %2248 = vmatpush1.xpose.msra.mxu0 %v2171
      %2249 = vmatprep.subr.mxu0 0.0
      %2250 = vmatpush1.xpose.msra.mxu0 %v2174
      %2251 = vmatprep.subr.mxu0 0.0
      %2252 = vmatpush1.xpose.msra.mxu0 %v2177
      %2253 = vmatprep.subr.mxu0 0.0
      %2254 = vmatpush1.xpose.msra.mxu0 %v2180
      %2255 = vmatprep.subr.mxu0 0.0
      %2256 = vmatpush1.xpose.msra.mxu0 %v2183
      %2257 = vmatprep.subr.mxu0 0.0
      %2258 = vmatpush1.xpose.msra.mxu0 %v2186
      %2259 = vmatprep.subr.mxu0 0.0
      %2260 = vmatpush1.xpose.msra.mxu0 %v2189
      %2261 = vmatprep.subr.mxu0 0.0
      %2262 = vmatpush1.xpose.msra.mxu0 %v2192
      %2263 = vmatprep.subr.mxu0 0.0
      %2264 = vmatpush1.xpose.msra.mxu0 %v2195
      %2265 = vmatprep.subr.mxu0 0.0
      %2266 = vmatpush1.xpose.msra.mxu0 %v2198
      %2267 = vmatprep.subr.mxu0 0.0
      %2268 = vmatpush1.xpose.msra.mxu0 %v2201
      %2269 = vmatprep.subr.mxu0 0.0
      %2270 = vmatpush1.xpose.msra.mxu0 %v2204
      %2271 = vmatprep.subr.mxu0 0.0
      %2272 = vmatpush1.xpose.msra.mxu0 %v2207
      %2273 = vmatprep.mubr.f32.mxu0 0.0
      %2274 = vmatmul.mubr.f32.gmra.mrb[0].mxu0 %v2111
      %v2275 = vpop.f32.mrb[0].mxu0
      %v2276 = vadd.f32 0.0, %v2275
      %v2277 = vpop.f32.mrb[0].mxu0
      %v2278 = vadd.f32 0.0, %v2277
      %2279 = vdwg.mxu0
      %v2280 = vadd.f32 %v2042, %v2276
      %v2281 = vadd.f32 %v2043, %v2278
      %v2282 = vld [vmem:[#allocation2 + $0x2f] sm:$0xff]
      %v2283 = vld [vmem:[#allocation2 + $0x37] sm:$0xff]
      %v2284 = vld [vmem:[#allocation2 + $0x3f] sm:$0xff]
      %v2285 = vld [vmem:[#allocation2 + $0x47] sm:$0xff]
      %v2286 = vld [vmem:[#allocation2 + $0x4f] sm:$0xff]
      %v2287 = vld [vmem:[#allocation2 + $0x57] sm:$0xff]
      %v2288 = vld [vmem:[#allocation2 + $0x5f] sm:$0xff]
      %v2289 = vld [vmem:[#allocation2 + $0x67] sm:$0xff]
      %v2290 = vld [vmem:[#allocation2 + $0x6f] sm:$0xff]
      %v2291 = vld [vmem:[#allocation2 + $0x77] sm:$0xff]
      %v2292 = vld [vmem:[#allocation2 + $0x7f] sm:$0xff]
      %v2293 = vld [vmem:[#allocation2 + $0x87] sm:$0xff]
      %v2294 = vld [vmem:[#allocation2 + $0x8f] sm:$0xff]
      %v2295 = vld [vmem:[#allocation2 + $0x97] sm:$0xff]
      %v2296 = vld [vmem:[#allocation2 + $0x9f] sm:$0xff]
      %v2297 = vld [vmem:[#allocation2 + $0xa7] sm:$0xff]
      %v2298 = vld [vmem:[#allocation2 + $0xaf] sm:$0xff]
      %v2299 = vld [vmem:[#allocation2 + $0xb7] sm:$0xff]
      %v2300 = vld [vmem:[#allocation2 + $0xbf] sm:$0xff]
      %v2301 = vld [vmem:[#allocation2 + $0xc7] sm:$0xff]
      %v2302 = vld [vmem:[#allocation2 + $0xcf] sm:$0xff]
      %v2303 = vld [vmem:[#allocation2 + $0xd7] sm:$0xff]
      %v2304 = vld [vmem:[#allocation2 + $0xdf] sm:$0xff]
      %v2305 = vld [vmem:[#allocation2 + $0xe7] sm:$0xff]
      %v2306 = vld [vmem:[#allocation2 + $0xef] sm:$0xff]
      %v2307 = vld [vmem:[#allocation2 + $0xf7] sm:$0xff]
      %v2308 = vld [vmem:[#allocation2 + $0xff] sm:$0xff]
      %v2309 = vld [vmem:[#allocation2 + $0x107] sm:$0xff]
      %v2310 = vld [vmem:[#allocation2 + $0x10f] sm:$0xff]
      %v2311 = vld [vmem:[#allocation2 + $0x117] sm:$0xff]
      %v2312 = vld [vmem:[#allocation2 + $0x11f] sm:$0xff]
      %v2313 = vld [vmem:[#allocation2 + $0x127] sm:$0xff]
      %v2314 = vsel %vm859, %v2282, 0.0
      %v2315 = vsel %vm860, %v2283, 0.0
      %v2316 = vsel %vm861, %v2284, 0.0
      %v2317 = vsel %vm862, %v2285, 0.0
      %v2318 = vsel %vm863, %v2286, 0.0
      %v2319 = vsel %vm864, %v2287, 0.0
      %v2320 = vsel %vm865, %v2288, 0.0
      %v2321 = vsel %vm866, %v2289, 0.0
      %v2322 = vsel %vm867, %v2290, 0.0
      %v2323 = vsel %vm868, %v2291, 0.0
      %v2324 = vsel %vm869, %v2292, 0.0
      %v2325 = vsel %vm870, %v2293, 0.0
      %v2326 = vsel %vm871, %v2294, 0.0
      %v2327 = vsel %vm872, %v2295, 0.0
      %v2328 = vsel %vm873, %v2296, 0.0
      %v2329 = vsel %vm874, %v2297, 0.0
      %v2330 = vsel %vm875, %v2298, 0.0
      %v2331 = vsel %vm876, %v2299, 0.0
      %v2332 = vsel %vm877, %v2300, 0.0
      %v2333 = vsel %vm878, %v2301, 0.0
      %v2334 = vsel %vm879, %v2302, 0.0
      %v2335 = vsel %vm880, %v2303, 0.0
      %v2336 = vsel %vm881, %v2304, 0.0
      %v2337 = vsel %vm882, %v2305, 0.0
      %v2338 = vsel %vm883, %v2306, 0.0
      %v2339 = vsel %vm884, %v2307, 0.0
      %v2340 = vsel %vm885, %v2308, 0.0
      %v2341 = vsel %vm886, %v2309, 0.0
      %v2342 = vsel %vm887, %v2310, 0.0
      %v2343 = vsel %vm888, %v2311, 0.0
      %v2344 = vsel %vm889, %v2312, 0.0
      %v2345 = vsel %vm890, %v2313, 0.0
      %s2346 = scalar_lea.vmem %s1, 48
      %v2347 = vld [vmem:[%s2346] sm:$0xff]
      %v2349 = vsel %vm209, %v2347, 0
      %v2352 = vsel %vm209, %v2314, 0
      %v2355 = vsel %vm209, %v2315, 0
      %v2358 = vsel %vm209, %v2316, 0
      %v2361 = vsel %vm209, %v2317, 0
      %v2364 = vsel %vm209, %v2318, 0
      %v2367 = vsel %vm209, %v2319, 0
      %v2370 = vsel %vm209, %v2320, 0
      %v2373 = vsel %vm209, %v2321, 0
      %v2376 = vsel %vm209, %v2322, 0
      %v2379 = vsel %vm209, %v2323, 0
      %v2382 = vsel %vm209, %v2324, 0
      %v2385 = vsel %vm209, %v2325, 0
      %v2388 = vsel %vm209, %v2326, 0
      %v2391 = vsel %vm209, %v2327, 0
      %v2394 = vsel %vm209, %v2328, 0
      %v2397 = vsel %vm209, %v2329, 0
      %v2400 = vsel %vm209, %v2330, 0
      %v2403 = vsel %vm209, %v2331, 0
      %v2406 = vsel %vm209, %v2332, 0
      %v2409 = vsel %vm209, %v2333, 0
      %v2412 = vsel %vm209, %v2334, 0
      %v2415 = vsel %vm209, %v2335, 0
      %v2418 = vsel %vm209, %v2336, 0
      %v2421 = vsel %vm209, %v2337, 0
      %v2424 = vsel %vm209, %v2338, 0
      %v2427 = vsel %vm209, %v2339, 0
      %v2430 = vsel %vm209, %v2340, 0
      %v2433 = vsel %vm209, %v2341, 0
      %v2436 = vsel %vm209, %v2342, 0
      %v2439 = vsel %vm209, %v2343, 0
      %v2442 = vsel %vm209, %v2344, 0
      %v2445 = vsel %vm209, %v2345, 0
      %2447 = vmatprep.subr.mxu0 0.0
      %2448 = vmatpush1.xpose.msra.mxu0 %v2352
      %2449 = vmatprep.subr.mxu0 0.0
      %2450 = vmatpush1.xpose.msra.mxu0 %v2355
      %2451 = vmatprep.subr.mxu0 0.0
      %2452 = vmatpush1.xpose.msra.mxu0 %v2358
      %2453 = vmatprep.subr.mxu0 0.0
      %2454 = vmatpush1.xpose.msra.mxu0 %v2361
      %2455 = vmatprep.subr.mxu0 0.0
      %2456 = vmatpush1.xpose.msra.mxu0 %v2364
      %2457 = vmatprep.subr.mxu0 0.0
      %2458 = vmatpush1.xpose.msra.mxu0 %v2367
      %2459 = vmatprep.subr.mxu0 0.0
      %2460 = vmatpush1.xpose.msra.mxu0 %v2370
      %2461 = vmatprep.subr.mxu0 0.0
      %2462 = vmatpush1.xpose.msra.mxu0 %v2373
      %2463 = vmatprep.subr.mxu0 0.0
      %2464 = vmatpush1.xpose.msra.mxu0 %v2376
      %2465 = vmatprep.subr.mxu0 0.0
      %2466 = vmatpush1.xpose.msra.mxu0 %v2379
      %2467 = vmatprep.subr.mxu0 0.0
      %2468 = vmatpush1.xpose.msra.mxu0 %v2382
      %2469 = vmatprep.subr.mxu0 0.0
      %2470 = vmatpush1.xpose.msra.mxu0 %v2385
      %2471 = vmatprep.subr.mxu0 0.0
      %2472 = vmatpush1.xpose.msra.mxu0 %v2388
      %2473 = vmatprep.subr.mxu0 0.0
      %2474 = vmatpush1.xpose.msra.mxu0 %v2391
      %2475 = vmatprep.subr.mxu0 0.0
      %2476 = vmatpush1.xpose.msra.mxu0 %v2394
      %2477 = vmatprep.subr.mxu0 0.0
      %2478 = vmatpush1.xpose.msra.mxu0 %v2397
      %2479 = vmatprep.subr.mxu0 0.0
      %2480 = vmatpush1.xpose.msra.mxu0 %v2400
      %2481 = vmatprep.subr.mxu0 0.0
      %2482 = vmatpush1.xpose.msra.mxu0 %v2403
      %2483 = vmatprep.subr.mxu0 0.0
      %2484 = vmatpush1.xpose.msra.mxu0 %v2406
      %2485 = vmatprep.subr.mxu0 0.0
      %2486 = vmatpush1.xpose.msra.mxu0 %v2409
      %2487 = vmatprep.subr.mxu0 0.0
      %2488 = vmatpush1.xpose.msra.mxu0 %v2412
      %2489 = vmatprep.subr.mxu0 0.0
      %2490 = vmatpush1.xpose.msra.mxu0 %v2415
      %2491 = vmatprep.subr.mxu0 0.0
      %2492 = vmatpush1.xpose.msra.mxu0 %v2418
      %2493 = vmatprep.subr.mxu0 0.0
      %2494 = vmatpush1.xpose.msra.mxu0 %v2421
      %2495 = vmatprep.subr.mxu0 0.0
      %2496 = vmatpush1.xpose.msra.mxu0 %v2424
      %2497 = vmatprep.subr.mxu0 0.0
      %2498 = vmatpush1.xpose.msra.mxu0 %v2427
      %2499 = vmatprep.subr.mxu0 0.0
      %2500 = vmatpush1.xpose.msra.mxu0 %v2430
      %2501 = vmatprep.subr.mxu0 0.0
      %2502 = vmatpush1.xpose.msra.mxu0 %v2433
      %2503 = vmatprep.subr.mxu0 0.0
      %2504 = vmatpush1.xpose.msra.mxu0 %v2436
      %2505 = vmatprep.subr.mxu0 0.0
      %2506 = vmatpush1.xpose.msra.mxu0 %v2439
      %2507 = vmatprep.subr.mxu0 0.0
      %2508 = vmatpush1.xpose.msra.mxu0 %v2442
      %2509 = vmatprep.subr.mxu0 0.0
      %2510 = vmatpush1.xpose.msra.mxu0 %v2445
      %2511 = vmatprep.mubr.f32.mxu0 0.0
      %2512 = vmatmul.mubr.f32.gmra.mrb[0].mxu0 %v2349
      %v2513 = vpop.f32.mrb[0].mxu0
      %v2514 = vadd.f32 0.0, %v2513
      %v2515 = vpop.f32.mrb[0].mxu0
      %v2516 = vadd.f32 0.0, %v2515
      %2517 = vdwg.mxu0
      %v2518 = vadd.f32 %v2280, %v2514
      %v2519 = vadd.f32 %v2281, %v2516
      %v2520 = vld [vmem:[#allocation2 + $0x30] sm:$0xff]
      %v2521 = vld [vmem:[#allocation2 + $0x38] sm:$0xff]
      %v2522 = vld [vmem:[#allocation2 + $0x40] sm:$0xff]
      %v2523 = vld [vmem:[#allocation2 + $0x48] sm:$0xff]
      %v2524 = vld [vmem:[#allocation2 + $0x50] sm:$0xff]
      %v2525 = vld [vmem:[#allocation2 + $0x58] sm:$0xff]
      %v2526 = vld [vmem:[#allocation2 + $0x60] sm:$0xff]
      %v2527 = vld [vmem:[#allocation2 + $0x68] sm:$0xff]
      %v2528 = vld [vmem:[#allocation2 + $0x70] sm:$0xff]
      %v2529 = vld [vmem:[#allocation2 + $0x78] sm:$0xff]
      %v2530 = vld [vmem:[#allocation2 + $0x80] sm:$0xff]
      %v2531 = vld [vmem:[#allocation2 + $0x88] sm:$0xff]
      %v2532 = vld [vmem:[#allocation2 + $0x90] sm:$0xff]
      %v2533 = vld [vmem:[#allocation2 + $0x98] sm:$0xff]
      %v2534 = vld [vmem:[#allocation2 + $0xa0] sm:$0xff]
      %v2535 = vld [vmem:[#allocation2 + $0xa8] sm:$0xff]
      %v2536 = vld [vmem:[#allocation2 + $0xb0] sm:$0xff]
      %v2537 = vld [vmem:[#allocation2 + $0xb8] sm:$0xff]
      %v2538 = vld [vmem:[#allocation2 + $0xc0] sm:$0xff]
      %v2539 = vld [vmem:[#allocation2 + $0xc8] sm:$0xff]
      %v2540 = vld [vmem:[#allocation2 + $0xd0] sm:$0xff]
      %v2541 = vld [vmem:[#allocation2 + $0xd8] sm:$0xff]
      %v2542 = vld [vmem:[#allocation2 + $0xe0] sm:$0xff]
      %v2543 = vld [vmem:[#allocation2 + $0xe8] sm:$0xff]
      %v2544 = vld [vmem:[#allocation2 + $0xf0] sm:$0xff]
      %v2545 = vld [vmem:[#allocation2 + $0xf8] sm:$0xff]
      %v2546 = vld [vmem:[#allocation2 + $0x100] sm:$0xff]
      %v2547 = vld [vmem:[#allocation2 + $0x108] sm:$0xff]
      %v2548 = vld [vmem:[#allocation2 + $0x110] sm:$0xff]
      %v2549 = vld [vmem:[#allocation2 + $0x118] sm:$0xff]
      %v2550 = vld [vmem:[#allocation2 + $0x120] sm:$0xff]
      %v2551 = vld [vmem:[#allocation2 + $0x128] sm:$0xff]
      %s2552 = scalar_lea.vmem %s1, 56
      %v2553 = vld [vmem:[%s2552] sm:$0xff]
      %v2555 = vsel %vm209, %v2553, 0
      %v2558 = vsel %vm209, %v2520, 0
      %v2561 = vsel %vm209, %v2521, 0
      %v2564 = vsel %vm209, %v2522, 0
      %v2567 = vsel %vm209, %v2523, 0
      %v2570 = vsel %vm209, %v2524, 0
      %v2573 = vsel %vm209, %v2525, 0
      %v2576 = vsel %vm209, %v2526, 0
      %v2579 = vsel %vm209, %v2527, 0
      %v2582 = vsel %vm209, %v2528, 0
      %v2585 = vsel %vm209, %v2529, 0
      %v2588 = vsel %vm209, %v2530, 0
      %v2591 = vsel %vm209, %v2531, 0
      %v2594 = vsel %vm209, %v2532, 0
      %v2597 = vsel %vm209, %v2533, 0
      %v2600 = vsel %vm209, %v2534, 0
      %v2603 = vsel %vm209, %v2535, 0
      %v2606 = vsel %vm209, %v2536, 0
      %v2609 = vsel %vm209, %v2537, 0
      %v2612 = vsel %vm209, %v2538, 0
      %v2615 = vsel %vm209, %v2539, 0
      %v2618 = vsel %vm209, %v2540, 0
      %v2621 = vsel %vm209, %v2541, 0
      %v2624 = vsel %vm209, %v2542, 0
      %v2627 = vsel %vm209, %v2543, 0
      %v2630 = vsel %vm209, %v2544, 0
      %v2633 = vsel %vm209, %v2545, 0
      %v2636 = vsel %vm209, %v2546, 0
      %v2639 = vsel %vm209, %v2547, 0
      %v2642 = vsel %vm209, %v2548, 0
      %v2645 = vsel %vm209, %v2549, 0
      %v2648 = vsel %vm209, %v2550, 0
      %v2651 = vsel %vm209, %v2551, 0
      %2653 = vmatprep.subr.mxu0 0.0
      %2654 = vmatpush1.xpose.msra.mxu0 %v2558
      %2655 = vmatprep.subr.mxu0 0.0
      %2656 = vmatpush1.xpose.msra.mxu0 %v2561
      %2657 = vmatprep.subr.mxu0 0.0
      %2658 = vmatpush1.xpose.msra.mxu0 %v2564
      %2659 = vmatprep.subr.mxu0 0.0
      %2660 = vmatpush1.xpose.msra.mxu0 %v2567
      %2661 = vmatprep.subr.mxu0 0.0
      %2662 = vmatpush1.xpose.msra.mxu0 %v2570
      %2663 = vmatprep.subr.mxu0 0.0
      %2664 = vmatpush1.xpose.msra.mxu0 %v2573
      %2665 = vmatprep.subr.mxu0 0.0
      %2666 = vmatpush1.xpose.msra.mxu0 %v2576
      %2667 = vmatprep.subr.mxu0 0.0
      %2668 = vmatpush1.xpose.msra.mxu0 %v2579
      %2669 = vmatprep.subr.mxu0 0.0
      %2670 = vmatpush1.xpose.msra.mxu0 %v2582
      %2671 = vmatprep.subr.mxu0 0.0
      %2672 = vmatpush1.xpose.msra.mxu0 %v2585
      %2673 = vmatprep.subr.mxu0 0.0
      %2674 = vmatpush1.xpose.msra.mxu0 %v2588
      %2675 = vmatprep.subr.mxu0 0.0
      %2676 = vmatpush1.xpose.msra.mxu0 %v2591
      %2677 = vmatprep.subr.mxu0 0.0
      %2678 = vmatpush1.xpose.msra.mxu0 %v2594
      %2679 = vmatprep.subr.mxu0 0.0
      %2680 = vmatpush1.xpose.msra.mxu0 %v2597
      %2681 = vmatprep.subr.mxu0 0.0
      %2682 = vmatpush1.xpose.msra.mxu0 %v2600
      %2683 = vmatprep.subr.mxu0 0.0
      %2684 = vmatpush1.xpose.msra.mxu0 %v2603
      %2685 = vmatprep.subr.mxu0 0.0
      %2686 = vmatpush1.xpose.msra.mxu0 %v2606
      %2687 = vmatprep.subr.mxu0 0.0
      %2688 = vmatpush1.xpose.msra.mxu0 %v2609
      %2689 = vmatprep.subr.mxu0 0.0
      %2690 = vmatpush1.xpose.msra.mxu0 %v2612
      %2691 = vmatprep.subr.mxu0 0.0
      %2692 = vmatpush1.xpose.msra.mxu0 %v2615
      %2693 = vmatprep.subr.mxu0 0.0
      %2694 = vmatpush1.xpose.msra.mxu0 %v2618
      %2695 = vmatprep.subr.mxu0 0.0
      %2696 = vmatpush1.xpose.msra.mxu0 %v2621
      %2697 = vmatprep.subr.mxu0 0.0
      %2698 = vmatpush1.xpose.msra.mxu0 %v2624
      %2699 = vmatprep.subr.mxu0 0.0
      %2700 = vmatpush1.xpose.msra.mxu0 %v2627
      %2701 = vmatprep.subr.mxu0 0.0
      %2702 = vmatpush1.xpose.msra.mxu0 %v2630
      %2703 = vmatprep.subr.mxu0 0.0
      %2704 = vmatpush1.xpose.msra.mxu0 %v2633
      %2705 = vmatprep.subr.mxu0 0.0
      %2706 = vmatpush1.xpose.msra.mxu0 %v2636
      %2707 = vmatprep.subr.mxu0 0.0
      %2708 = vmatpush1.xpose.msra.mxu0 %v2639
      %2709 = vmatprep.subr.mxu0 0.0
      %2710 = vmatpush1.xpose.msra.mxu0 %v2642
      %2711 = vmatprep.subr.mxu0 0.0
      %2712 = vmatpush1.xpose.msra.mxu0 %v2645
      %2713 = vmatprep.subr.mxu0 0.0
      %2714 = vmatpush1.xpose.msra.mxu0 %v2648
      %2715 = vmatprep.subr.mxu0 0.0
      %2716 = vmatpush1.xpose.msra.mxu0 %v2651
      %2717 = vmatprep.mubr.f32.mxu0 0.0
      %2718 = vmatmul.mubr.f32.gmra.mrb[0].mxu0 %v2555
      %v2719 = vpop.f32.mrb[0].mxu0
      %v2720 = vadd.f32 0.0, %v2719
      %v2721 = vpop.f32.mrb[0].mxu0
      %v2722 = vadd.f32 0.0, %v2721
      %2723 = vdwg.mxu0
      %v2724 = vadd.f32 %v2518, %v2720
      %v2725 = vadd.f32 %v2519, %v2722
      %v2726 = vld [vmem:[#allocation2 + $0x31] sm:$0xff]
      %v2727 = vld [vmem:[#allocation2 + $0x39] sm:$0xff]
      %v2728 = vld [vmem:[#allocation2 + $0x41] sm:$0xff]
      %v2729 = vld [vmem:[#allocation2 + $0x49] sm:$0xff]
      %v2730 = vld [vmem:[#allocation2 + $0x51] sm:$0xff]
      %v2731 = vld [vmem:[#allocation2 + $0x59] sm:$0xff]
      %v2732 = vld [vmem:[#allocation2 + $0x61] sm:$0xff]
      %v2733 = vld [vmem:[#allocation2 + $0x69] sm:$0xff]
      %v2734 = vld [vmem:[#allocation2 + $0x71] sm:$0xff]
      %v2735 = vld [vmem:[#allocation2 + $0x79] sm:$0xff]
      %v2736 = vld [vmem:[#allocation2 + $0x81] sm:$0xff]
      %v2737 = vld [vmem:[#allocation2 + $0x89] sm:$0xff]
      %v2738 = vld [vmem:[#allocation2 + $0x91] sm:$0xff]
      %v2739 = vld [vmem:[#allocation2 + $0x99] sm:$0xff]
      %v2740 = vld [vmem:[#allocation2 + $0xa1] sm:$0xff]
      %v2741 = vld [vmem:[#allocation2 + $0xa9] sm:$0xff]
      %v2742 = vld [vmem:[#allocation2 + $0xb1] sm:$0xff]
      %v2743 = vld [vmem:[#allocation2 + $0xb9] sm:$0xff]
      %v2744 = vld [vmem:[#allocation2 + $0xc1] sm:$0xff]
      %v2745 = vld [vmem:[#allocation2 + $0xc9] sm:$0xff]
      %v2746 = vld [vmem:[#allocation2 + $0xd1] sm:$0xff]
      %v2747 = vld [vmem:[#allocation2 + $0xd9] sm:$0xff]
      %v2748 = vld [vmem:[#allocation2 + $0xe1] sm:$0xff]
      %v2749 = vld [vmem:[#allocation2 + $0xe9] sm:$0xff]
      %v2750 = vld [vmem:[#allocation2 + $0xf1] sm:$0xff]
      %v2751 = vld [vmem:[#allocation2 + $0xf9] sm:$0xff]
      %v2752 = vld [vmem:[#allocation2 + $0x101] sm:$0xff]
      %v2753 = vld [vmem:[#allocation2 + $0x109] sm:$0xff]
      %v2754 = vld [vmem:[#allocation2 + $0x111] sm:$0xff]
      %v2755 = vld [vmem:[#allocation2 + $0x119] sm:$0xff]
      %v2756 = vld [vmem:[#allocation2 + $0x121] sm:$0xff]
      %v2757 = vld [vmem:[#allocation2 + $0x129] sm:$0xff]
      %v2758 = vsel %vm1362, %v2726, 0.0
      %v2759 = vsel %vm1363, %v2727, 0.0
      %v2760 = vsel %vm1364, %v2728, 0.0
      %v2761 = vsel %vm1365, %v2729, 0.0
      %v2762 = vsel %vm1366, %v2730, 0.0
      %v2763 = vsel %vm1367, %v2731, 0.0
      %v2764 = vsel %vm1368, %v2732, 0.0
      %v2765 = vsel %vm1369, %v2733, 0.0
      %v2766 = vsel %vm1370, %v2734, 0.0
      %v2767 = vsel %vm1371, %v2735, 0.0
      %v2768 = vsel %vm1372, %v2736, 0.0
      %v2769 = vsel %vm1373, %v2737, 0.0
      %v2770 = vsel %vm1374, %v2738, 0.0
      %v2771 = vsel %vm1375, %v2739, 0.0
      %v2772 = vsel %vm1376, %v2740, 0.0
      %v2773 = vsel %vm1377, %v2741, 0.0
      %v2774 = vsel %vm1378, %v2742, 0.0
      %v2775 = vsel %vm1379, %v2743, 0.0
      %v2776 = vsel %vm1380, %v2744, 0.0
      %v2777 = vsel %vm1381, %v2745, 0.0
      %v2778 = vsel %vm1382, %v2746, 0.0
      %v2779 = vsel %vm1383, %v2747, 0.0
      %v2780 = vsel %vm1384, %v2748, 0.0
      %v2781 = vsel %vm1385, %v2749, 0.0
      %v2782 = vsel %vm1386, %v2750, 0.0
      %v2783 = vsel %vm1387, %v2751, 0.0
      %v2784 = vsel %vm1388, %v2752, 0.0
      %v2785 = vsel %vm1389, %v2753, 0.0
      %v2786 = vsel %vm1390, %v2754, 0.0
      %v2787 = vsel %vm1391, %v2755, 0.0
      %v2788 = vsel %vm1392, %v2756, 0.0
      %v2789 = vsel %vm1393, %v2757, 0.0
      %s2790 = scalar_lea.vmem %s1, 64
      %v2791 = vld [vmem:[%s2790] sm:$0xff]
      %v2793 = vsel %vm209, %v2791, 0
      %v2796 = vsel %vm209, %v2758, 0
      %v2799 = vsel %vm209, %v2759, 0
      %v2802 = vsel %vm209, %v2760, 0
      %v2805 = vsel %vm209, %v2761, 0
      %v2808 = vsel %vm209, %v2762, 0
      %v2811 = vsel %vm209, %v2763, 0
      %v2814 = vsel %vm209, %v2764, 0
      %v2817 = vsel %vm209, %v2765, 0
      %v2820 = vsel %vm209, %v2766, 0
      %v2823 = vsel %vm209, %v2767, 0
      %v2826 = vsel %vm209, %v2768, 0
      %v2829 = vsel %vm209, %v2769, 0
      %v2832 = vsel %vm209, %v2770, 0
      %v2835 = vsel %vm209, %v2771, 0
      %v2838 = vsel %vm209, %v2772, 0
      %v2841 = vsel %vm209, %v2773, 0
      %v2844 = vsel %vm209, %v2774, 0
      %v2847 = vsel %vm209, %v2775, 0
      %v2850 = vsel %vm209, %v2776, 0
      %v2853 = vsel %vm209, %v2777, 0
      %v2856 = vsel %vm209, %v2778, 0
      %v2859 = vsel %vm209, %v2779, 0
      %v2862 = vsel %vm209, %v2780, 0
      %v2865 = vsel %vm209, %v2781, 0
      %v2868 = vsel %vm209, %v2782, 0
      %v2871 = vsel %vm209, %v2783, 0
      %v2874 = vsel %vm209, %v2784, 0
      %v2877 = vsel %vm209, %v2785, 0
      %v2880 = vsel %vm209, %v2786, 0
      %v2883 = vsel %vm209, %v2787, 0
      %v2886 = vsel %vm209, %v2788, 0
      %v2889 = vsel %vm209, %v2789, 0
      %2891 = vmatprep.subr.mxu0 0.0
      %2892 = vmatpush1.xpose.msra.mxu0 %v2796
      %2893 = vmatprep.subr.mxu0 0.0
      %2894 = vmatpush1.xpose.msra.mxu0 %v2799
      %2895 = vmatprep.subr.mxu0 0.0
      %2896 = vmatpush1.xpose.msra.mxu0 %v2802
      %2897 = vmatprep.subr.mxu0 0.0
      %2898 = vmatpush1.xpose.msra.mxu0 %v2805
      %2899 = vmatprep.subr.mxu0 0.0
      %2900 = vmatpush1.xpose.msra.mxu0 %v2808
      %2901 = vmatprep.subr.mxu0 0.0
      %2902 = vmatpush1.xpose.msra.mxu0 %v2811
      %2903 = vmatprep.subr.mxu0 0.0
      %2904 = vmatpush1.xpose.msra.mxu0 %v2814
      %2905 = vmatprep.subr.mxu0 0.0
      %2906 = vmatpush1.xpose.msra.mxu0 %v2817
      %2907 = vmatprep.subr.mxu0 0.0
      %2908 = vmatpush1.xpose.msra.mxu0 %v2820
      %2909 = vmatprep.subr.mxu0 0.0
      %2910 = vmatpush1.xpose.msra.mxu0 %v2823
      %2911 = vmatprep.subr.mxu0 0.0
      %2912 = vmatpush1.xpose.msra.mxu0 %v2826
      %2913 = vmatprep.subr.mxu0 0.0
      %2914 = vmatpush1.xpose.msra.mxu0 %v2829
      %2915 = vmatprep.subr.mxu0 0.0
      %2916 = vmatpush1.xpose.msra.mxu0 %v2832
      %2917 = vmatprep.subr.mxu0 0.0
      %2918 = vmatpush1.xpose.msra.mxu0 %v2835
      %2919 = vmatprep.subr.mxu0 0.0
      %2920 = vmatpush1.xpose.msra.mxu0 %v2838
      %2921 = vmatprep.subr.mxu0 0.0
      %2922 = vmatpush1.xpose.msra.mxu0 %v2841
      %2923 = vmatprep.subr.mxu0 0.0
      %2924 = vmatpush1.xpose.msra.mxu0 %v2844
      %2925 = vmatprep.subr.mxu0 0.0
      %2926 = vmatpush1.xpose.msra.mxu0 %v2847
      %2927 = vmatprep.subr.mxu0 0.0
      %2928 = vmatpush1.xpose.msra.mxu0 %v2850
      %2929 = vmatprep.subr.mxu0 0.0
      %2930 = vmatpush1.xpose.msra.mxu0 %v2853
      %2931 = vmatprep.subr.mxu0 0.0
      %2932 = vmatpush1.xpose.msra.mxu0 %v2856
      %2933 = vmatprep.subr.mxu0 0.0
      %2934 = vmatpush1.xpose.msra.mxu0 %v2859
      %2935 = vmatprep.subr.mxu0 0.0
      %2936 = vmatpush1.xpose.msra.mxu0 %v2862
      %2937 = vmatprep.subr.mxu0 0.0
      %2938 = vmatpush1.xpose.msra.mxu0 %v2865
      %2939 = vmatprep.subr.mxu0 0.0
      %2940 = vmatpush1.xpose.msra.mxu0 %v2868
      %2941 = vmatprep.subr.mxu0 0.0
      %2942 = vmatpush1.xpose.msra.mxu0 %v2871
      %2943 = vmatprep.subr.mxu0 0.0
      %2944 = vmatpush1.xpose.msra.mxu0 %v2874
      %2945 = vmatprep.subr.mxu0 0.0
      %2946 = vmatpush1.xpose.msra.mxu0 %v2877
      %2947 = vmatprep.subr.mxu0 0.0
      %2948 = vmatpush1.xpose.msra.mxu0 %v2880
      %2949 = vmatprep.subr.mxu0 0.0
      %2950 = vmatpush1.xpose.msra.mxu0 %v2883
      %2951 = vmatprep.subr.mxu0 0.0
      %2952 = vmatpush1.xpose.msra.mxu0 %v2886
      %2953 = vmatprep.subr.mxu0 0.0
      %2954 = vmatpush1.xpose.msra.mxu0 %v2889
      %2955 = vmatprep.mubr.f32.mxu0 0.0
      %2956 = vmatmul.mubr.f32.gmra.mrb[0].mxu0 %v2793
      %v2957 = vpop.f32.mrb[0].mxu0
      %v2958 = vadd.f32 0.0, %v2957
      %v2959 = vpop.f32.mrb[0].mxu0
      %v2960 = vadd.f32 0.0, %v2959
      %2961 = vdwg.mxu0
      %v2962 = vadd.f32 %v2724, %v2958
      %v2963 = vadd.f32 %v2725, %v2960
      %v2964 = vld [vmem:[%s2] sm:$0xff]
      %2966 = vset.pattern.permute.xlu0 0
      %2967 = vperm.xlu0 %2966, %v2964
      %v2968 = vpop.permute.xlu0 %2967
      %v2970 = vadd.f32 %v2962, %v2968
      %v2971 = vadd.f32 %v2963, %v2968
      %v2972 = vmax.f32 %v2970, 0.0
      %v2973 = vmax.f32 %v2971, 0.0
      %2974 = vst [vmem:[%s204] sm:$0xff] %v2972
      %2975 = vst [vmem:[%s204 + $0x8] sm:$0xff] %v2973
      %v2976 = vadd.f32 %v2972, %v2973
      %2977 = vadd.xlane.f32.xlu0 %v2976
      %v2978 = vpop.xlane.xlu0 %2977
      %v2979 = vrcp.pop 256.0
      %v2980 = vmul.f32 %v2978, %v2979
      %vm2981 = vcmask 7168
      %2982 = vst.msk [vmem:[%s208] sm:$0xff] %vm2981, %v2980
      %p2983 = scmp.lt.s32.totalorder %s16, 1
      %s2984 = scalar_select %p2983, %s16, 1
      %s2985 = smul.addr %s2984, 2
      %s2986 = smul.addr %s2985, 8
      %s2987 = scalar_lea.vmem %s3, %s2986
      %p2988 = scmp.lt.s32.totalorder %s16, 1
      %s2989 = scalar_select %p2988, %s16, 1
      %s2990 = smul.addr %s2989, 8
      %s2991 = scalar_lea.vmem %s4, %s2990
      // Predicated region
      $region33: #{feature_extractor_forward.1} parent=31 // pred_check
        %p2992 = pneg %p102
      $region34: #{feature_extractor_forward.1} parent=31 // pred_check_branch
        %2994 = sbr.rel (%p2992) target = $region36
      $region35: #{feature_extractor_forward.1} parent=31 // pred_region
        _
      $region36: #{feature_extractor_forward.1} parent=31 // pred_fallthru
        _
      // Predicated region
      $region37: #{feature_extractor_forward.1} parent=31 // pred_check
        %p2995 = pneg %p128
      $region38: #{feature_extractor_forward.1} parent=31 // pred_check_branch
        %2997 = sbr.rel (%p2995) target = $region40
      $region39: #{feature_extractor_forward.1} parent=31 // pred_region
        _
      $region40: #{feature_extractor_forward.1} parent=31 // pred_fallthru
        _
    $region32: #{feature_extractor_forward.1} parent=5 // pred_fallthru
      _
    %p2998 = scmp.le.s32.totalorder 2, %s11
    // Predicated region
    $region41: #{feature_extractor_forward.1} parent=5 // pred_check
      %p2999 = pneg %p2998
    $region42: #{feature_extractor_forward.1} parent=5 // pred_check_branch
      %3001 = sbr.rel (%p2999) target = $region44
    $region43: #{feature_extractor_forward.1} parent=5 // pred_region
      %s3002 = ssub.s32 %s11, 2
      // Predicated region
      $region45: #{feature_extractor_forward.1} parent=43 // pred_check
        %p3003 = pneg %p108
      $region46: #{feature_extractor_forward.1} parent=43 // pred_check_branch
        %3005 = sbr.rel (%p3003) target = $region48
      $region47: #{feature_extractor_forward.1} parent=43 // pred_region
        %p3006 = scmp.lt.s32.totalorder %s17, 1
        %s3007 = scalar_select %p3006, %s17, 1
        %s3008 = smul.addr %s3007, 2
        %s3009 = smul.addr %s3008, 8
        %s3010 = scalar_lea.vmem %s3, %s3009
      $region48: #{feature_extractor_forward.1} parent=43 // pred_fallthru
        _
      // Predicated region
      $region49: #{feature_extractor_forward.1} parent=43 // pred_check
        %p3011 = pneg %p134
      $region50: #{feature_extractor_forward.1} parent=43 // pred_check_branch
        %3013 = sbr.rel (%p3011) target = $region52
      $region51: #{feature_extractor_forward.1} parent=43 // pred_region
        %p3014 = scmp.lt.s32.totalorder %s17, 1
        %s3015 = scalar_select %p3014, %s17, 1
        %s3016 = smul.addr %s3015, 8
        %s3017 = scalar_lea.vmem %s4, %s3016
      $region52: #{feature_extractor_forward.1} parent=43 // pred_fallthru
        _
    $region44: #{feature_extractor_forward.1} parent=5 // pred_fallthru
      _
  $region6: #{feature_extractor_forward.1} parent=0 // loop_footer
    %s15 = sadd.s32 1, %s11
  $region7: #{feature_extractor_forward.1} parent=0 // loop_footer_branch
    %10 = sbr.rel target = $region3
  $region8: #{feature_extractor_forward.1} parent=0 // loop_exit
    _

</llo_original>
